<compile_context>
chip_gen: v7x
topology: tpu7x:2x2x1
jax: 0.10.0
libtpu: 0.0.40
codegen_flags: <defaults>
</compile_context>

<pallas_src>
import jax
import jax.numpy as jnp
from jax.experimental import pallas as pl
from jax.experimental.pallas import tpu as pltpu

NUM_CLASSES = 10


# ------------------------------- small helpers -------------------------------

def _round_up(x, m):
    return -(-x // m) * m


def _largest_divisor_at_most(n, cap):
    cap = max(1, min(n, cap))
    for d in range(cap, 0, -1):
        if n % d == 0:
            return d
    return 1


def _block_vmem_bytes(shape, dtype):
    """Approximate padded VMEM footprint of one block (lane->128, sublane->8)."""
    itemsize = jnp.dtype(dtype).itemsize
    if len(shape) == 0:
        return 4
    if len(shape) == 1:
        return _round_up(shape[0], 128) * itemsize
    lead = 1
    for d in shape[:-2]:
        lead *= d
    return lead * _round_up(shape[-2], 8) * _round_up(shape[-1], 128) * itemsize


def _pick_batch_tile(n, per_sample_bytes, *, budget_bytes=12 << 20, min_steps=4):
    """Largest bn giving >= min_steps grid steps while fitting the VMEM budget."""
    by_budget = max(1, budget_bytes // max(per_sample_bytes, 1))
    by_steps = max(1, _round_up(n, min_steps) // min_steps)
    return int(max(1, min(n, by_budget, by_steps)))


def _pad_axis0(x, n_to):
    n = x.shape[0]
    if n_to == n:
        return x
    return jnp.pad(x, ((0, n_to - n),) + ((0, 0),) * (x.ndim - 1))


def _vmem_limit(est_bytes):
    return int(min(max(2 * est_bytes, 32 << 20), 64 << 20))


# -------- layer 1: wrapper im2col (lane-dense) + GEMM + bias + ReLU + pool --------

def _make_conv1_kernel(bn, Ho, Wo, Kp4, Cout):
    M = bn * Ho * Wo

    def kernel(p_ref, w_ref, b_ref, o_ref):
        # p_ref: (bn, Ho, Wo, 4*Kp) -- im2col patches of the 4 pooling
        #        sub-positions packed along the lane axis (lane-dense).
        # w_ref: (4*Kp, 4*Cout) block-diagonal weight, bf16.
        # One MXU matmul produces all four sub-positions' conv outputs side by
        # side; the 2x2 max-pool is the max over the four Cout-wide groups.
        y = jnp.dot(p_ref[...].reshape(M, Kp4), w_ref[...],
                    preferred_element_type=jnp.float32)          # (M, 4*Cout)
        pooled = y[:, 0:Cout]
        for p in range(1, 4):
            pooled = jnp.maximum(pooled, y[:, p * Cout:(p + 1) * Cout])
        out = jnp.maximum(pooled + b_ref[...], 0.0)               # bias + ReLU
        o_ref[...] = out.reshape(bn, Ho, Wo, Cout).astype(o_ref.dtype)

    return kernel


def conv1_gemm_relu_pool(x_nhwc, w, b, *, batch_tile=None):
    """Conv2d(3x3, pad=1, small Cin) + bias + ReLU + MaxPool2d(2)."""
    N, H, W, Cin = x_nhwc.shape
    Cout = w.shape[-1]
    assert H % 2 == 0 and W % 2 == 0
    Ho, Wo = H // 2, W // 2
    K = 9 * Cin
    Kp = _round_up(K, 32)                      # 32-aligned per sub-position

    xp = jnp.pad(x_nhwc, ((0, 0), (1, 1), (1, 1), (0, 0))).astype(jnp.bfloat16)

    def patches(dr, dc):                       # (N, Ho, Wo, Kp)
        taps = [xp[:, dr + ki: dr + ki + 2 * Ho: 2,
                   dc + kj: dc + kj + 2 * Wo: 2, :]
                for ki in range(3) for kj in range(3)]
        p = jnp.concatenate(taps, axis=-1)
        return jnp.pad(p, ((0, 0), (0, 0), (0, 0), (0, Kp - K)))

    packed = jnp.concatenate(
        [patches(dr, dc) for dr in (0, 1) for dc in (0, 1)],
        axis=-1)                               # (N, Ho, Wo, 4*Kp) -- lane-dense

    wk = jnp.pad(w.reshape(K, Cout), ((0, Kp - K), (0, 0)))
    wblk = jnp.zeros((4 * Kp, 4 * Cout), jnp.float32)
    for p in range(4):                         # block-diagonal weight
        wblk = wblk.at[p * Kp:(p + 1) * Kp, p * Cout:(p + 1) * Cout].set(wk)
    wblk = wblk.astype(jnp.bfloat16)
    b2d = b.reshape(1, Cout).astype(jnp.float32)

    per_sample = 3 * (2 * _block_vmem_bytes((1, Ho, Wo, 4 * Kp), jnp.bfloat16)
                      + 2 * _block_vmem_bytes((1, Ho, Wo, Cout), jnp.bfloat16)
                      + _block_vmem_bytes((Ho * Wo, 4 * Cout), jnp.float32))
    bn = batch_tile or _pick_batch_tile(N, per_sample)
    Np = _round_up(N, bn)
    packed = _pad_axis0(packed, Np)
    est = bn * per_sample + _block_vmem_bytes((4 * Kp, 4 * Cout), jnp.bfloat16)

    kernel = _make_conv1_kernel(bn, Ho, Wo, 4 * Kp, Cout)
    out = pl.pallas_call(
        kernel,
        out_shape=jax.ShapeDtypeStruct((Np, Ho, Wo, Cout), jnp.bfloat16),
        grid=(Np // bn,),
        in_specs=[pl.BlockSpec((bn, Ho, Wo, 4 * Kp), lambda i: (i, 0, 0, 0)),
                  pl.BlockSpec((4 * Kp, 4 * Cout), lambda i: (0, 0)),
                  pl.BlockSpec((1, Cout), lambda i: (0, 0))],
        out_specs=pl.BlockSpec((bn, Ho, Wo, Cout), lambda i: (i, 0, 0, 0)),
        compiler_params=pltpu.CompilerParams(
            dimension_semantics=("parallel",),
            vmem_limit_bytes=_vmem_limit(est)),
    )(packed, wblk, b2d)
    return out[:N]


# ---- layer 2: fused conv + bias + ReLU + pool, in-kernel concatenated-K im2col ----

def _make_conv2_kernel(bn, Ho, Wo, Cin, Cout):
    M = bn * Ho * Wo

    def kernel(q00_ref, q01_ref, q10_ref, q11_ref, w_ref, b_ref, o_ref, col_ref):
        # q??_ref : (bn, Ho+1, Wo+1, Cin) parity quadrants of the zero-padded
        #           input ((row parity, col parity) of the padded index).
        # w_ref   : (9*Cin, Cout) bf16 ; b_ref : (1, Cout) f32.
        # col_ref : (M, 9*Cin) bf16 VMEM scratch, reused for all 4 sub-positions.
        # o_ref   : (bn, Ho, Wo, Cout) = maxpool2x2(relu(conv3x3(x) + b)).
        quads = ((q00_ref, q01_ref), (q10_ref, q11_ref))
        w = w_ref[...]

        # 16 distinct shifted windows: conv row shift s = dr+ki in [0,3],
        # conv col shift t = dc+kj in [0,3]; load each once from the refs.
        win = {}
        for s in range(4):
            for t in range(4):
                q = quads[s % 2][t % 2]
                win[(s, t)] = q[:, s // 2:s // 2 + Ho,
                                t // 2:t // 2 + Wo, :].reshape(M, Cin)

        pooled = None
        for dr in (0, 1):                      # pooling sub-position (row, col)
            for dc in (0, 1):
                # concatenated-K im2col tile for this sub-position
                for ki in range(3):
                    for kj in range(3):
                        tap = 3 * ki + kj
                        col_ref[:, tap * Cin:(tap + 1) * Cin] = win[(dr + ki, dc + kj)]
                y = jnp.dot(col_ref[...], w, preferred_element_type=jnp.float32)
                pooled = y if pooled is None else jnp.maximum(pooled, y)

        out = jnp.maximum(pooled + b_ref[...], 0.0)
        o_ref[...] = out.reshape(bn, Ho, Wo, Cout).astype(o_ref.dtype)

    return kernel


def conv2_quad_relu_pool(x_nhwc, w, b, *, batch_tile=None):
    """Conv2d(3x3, pad=1) + bias + ReLU + MaxPool2d(2), fused."""
    N, H, W, Cin = x_nhwc.shape
    Cout = w.shape[-1]
    assert H % 2 == 0 and W % 2 == 0
    Ho, Wo = H // 2, W // 2
    Hq, Wq = Ho + 1, Wo + 1

    xp = jnp.pad(x_nhwc.astype(jnp.bfloat16), ((0, 0), (1, 1), (1, 1), (0, 0)))
    quads = [xp[:, rp::2, cp::2, :] for rp in (0, 1) for cp in (0, 1)]

    wk = w.reshape(9 * Cin, Cout).astype(jnp.bfloat16)
    b2d = b.reshape(1, Cout).astype(jnp.float32)

    per_sample = 2 * (4 * 2 * _block_vmem_bytes((1, Hq, Wq, Cin), jnp.bfloat16)
                      + 2 * _block_vmem_bytes((1, Ho, Wo, Cout), jnp.bfloat16)
                      + _block_vmem_bytes((Ho * Wo, 9 * Cin), jnp.bfloat16)
                      + 2 * _block_vmem_bytes((Ho * Wo, Cout), jnp.float32))
    bn = batch_tile or _pick_batch_tile(N, per_sample)
    Np = _round_up(N, bn)
    quads = [_pad_axis0(q, Np) for q in quads]
    est = bn * per_sample + _block_vmem_bytes((9 * Cin, Cout), jnp.bfloat16)

    quad_spec = pl.BlockSpec((bn, Hq, Wq, Cin), lambda i: (i, 0, 0, 0))
    kernel = _make_conv2_kernel(bn, Ho, Wo, Cin, Cout)
    out = pl.pallas_call(
        kernel,
        out_shape=jax.ShapeDtypeStruct((Np, Ho, Wo, Cout), jnp.bfloat16),
        grid=(Np // bn,),
        in_specs=[quad_spec, quad_spec, quad_spec, quad_spec,
                  pl.BlockSpec((9 * Cin, Cout), lambda i: (0, 0)),
                  pl.BlockSpec((1, Cout), lambda i: (0, 0))],
        out_specs=pl.BlockSpec((bn, Ho, Wo, Cout), lambda i: (i, 0, 0, 0)),
        scratch_shapes=[pltpu.VMEM((bn * Ho * Wo, 9 * Cin), jnp.bfloat16)],
        compiler_params=pltpu.CompilerParams(
            dimension_semantics=("parallel",),
            vmem_limit_bytes=_vmem_limit(est)),
    )(*quads, wk, b2d)
    return out[:N]


# --------------------------- mean over (T, spatial) + linear ---------------------------

def _make_head_kernel(B, S, C, tT, T):
    inv = 1.0 / float(T * S)

    def kernel(f_ref, w_ref, b_ref, o_ref, acc_ref):
        i = pl.program_id(0)

        @pl.when(i == 0)
        def _():
            acc_ref[...] = jnp.zeros_like(acc_ref)

        f = f_ref[...].astype(jnp.float32)                        # (tT, B*S, C)
        acc_ref[...] += f.reshape(tT, B, S, C).sum(axis=(0, 2))   # per-batch sums

        @pl.when(i == pl.num_programs(0) - 1)
        def _():
            mean = acc_ref[...] * inv                             # (B, C)
            o_ref[...] = (jnp.dot(mean, w_ref[...],
                                  preferred_element_type=jnp.float32)
                          + b_ref[...]).astype(o_ref.dtype)

    return kernel


def mean_pool_linear(feats_tbs, w, b, *, batch, spatial, frame_tile=None):
    """feats_tbs: (T, B*S, C) bf16 -> (B, NUM_CLASSES) f32."""
    T, BS, C = feats_tbs.shape
    B, S = batch, spatial
    assert BS == B * S
    Nc = w.shape[-1]
    if frame_tile is None:
        per_frame = BS * C * feats_tbs.dtype.itemsize
        frame_tile = _largest_divisor_at_most(T, max(1, (1 << 20) // max(per_frame, 1)))
    tT = frame_tile
    assert T % tT == 0

    kernel = _make_head_kernel(B, S, C, tT, T)
    return pl.pallas_call(
        kernel,
        out_shape=jax.ShapeDtypeStruct((B, Nc), jnp.float32),
        grid=(T // tT,),
        in_specs=[pl.BlockSpec((tT, BS, C), lambda t: (t, 0, 0)),
                  pl.BlockSpec((C, Nc), lambda t: (0, 0)),
                  pl.BlockSpec((1, Nc), lambda t: (0, 0))],
        out_specs=pl.BlockSpec((B, Nc), lambda t: (0, 0)),
        scratch_shapes=[pltpu.VMEM((B, C), jnp.float32)],
        compiler_params=pltpu.CompilerParams(
            dimension_semantics=("arbitrary",)),
    )(feats_tbs, w.astype(jnp.float32), b.reshape(1, Nc).astype(jnp.float32))


# ------------------------------------- model -------------------------------------

def late_fusion_pooling(video_frames, params):
    """video_frames: (T, B, Cin, H, W) — same iteration convention as the
    PyTorch forward (`for frame in video_frames` loops over dim 0)."""
    T, B, Cin, H, W = video_frames.shape
    x = video_frames.reshape(T * B, Cin, H, W).transpose(0, 2, 3, 1)   # NCHW -> NHWC
    x = conv1_gemm_relu_pool(x, params["w1"], params["b1"])   # (T*B, H/2, W/2, 64)
    x = conv2_quad_relu_pool(x, params["w2"], params["b2"])   # (T*B, H/4, W/4, 128)
    TB, Hf, Wf, C = x.shape
    # torch: stack(dim=1) -> (B, T, 128, Hf, Wf); mean over dims [1, 3, 4].
    # The reduction is permutation-invariant, so no (T,B)->(B,T) transpose:
    # reduce directly over the native (T, B*Hf*Wf, C) layout (free reshape).
    feats = x.reshape(T, B * Hf * Wf, C)
    return mean_pool_linear(feats, params["wm"], params["bm"],
                            batch=B, spatial=Hf * Wf)


def init_params(key):
    k1, k2, k3, k4, k5, k6 = jax.random.split(key, 6)
    return {
        "w1": 0.1 * jax.random.normal(k1, (3, 3, 3, 64), jnp.float32),
        "b1": 0.01 * jax.random.normal(k2, (64,), jnp.float32),
        "w2": 0.05 * jax.random.normal(k3, (3, 3, 64, 128), jnp.float32),
        "b2": 0.01 * jax.random.normal(k4, (128,), jnp.float32),
        "wm": 0.1 * jax.random.normal(k5, (128, NUM_CLASSES), jnp.float32),
        "bm": 0.01 * jax.random.normal(k6, (NUM_CLASSES,), jnp.float32),
    }


def _reference(video_frames, params):
    # pure-JAX f32 reference of the same forward pass
    T, B, Cin, H, W = video_frames.shape
    x = video_frames.reshape(T * B, Cin, H, W).transpose(0, 2, 3, 1)

    def conv_relu_pool(x, w, b):
        y = jax.lax.conv_general_dilated(
            x, w, window_strides=(1, 1), padding="SAME",
            dimension_numbers=("NHWC", "HWIO", "NHWC"))
        y = jax.nn.relu(y + b)
        return jax.lax.reduce_window(y, -jnp.inf, jax.lax.max,
                                     (1, 2, 2, 1), (1, 2, 2, 1), "VALID")

    x = conv_relu_pool(x, params["w1"], params["b1"])
    x = conv_relu_pool(x, params["w2"], params["b2"])
    TB, Hf, Wf, C = x.shape
    feats = x.reshape(T, B, Hf * Wf, C)
    pooled = feats.mean(axis=(0, 2))            # mean over frames + spatial
    return pooled @ params["wm"] + params["bm"]


if __name__ == "__main__":
    key = jax.random.PRNGKey(0)
    kx, kp = jax.random.split(key)
    T, B, Cin, H, W = 4, 2, 3, 32, 32
    video_frames = jax.random.normal(kx, (T, B, Cin, H, W), jnp.float32)
    params = init_params(kp)

    out = jax.block_until_ready(late_fusion_pooling(video_frames, params))
    assert out.shape == (B, NUM_CLASSES)
    assert bool(jnp.all(jnp.isfinite(out)))

    # loose tolerance: Pallas path uses bf16 activations/weights with f32 accumulation
    ref = jax.block_until_ready(_reference(video_frames, params))
    err = float(jnp.max(jnp.abs(out - ref)))
    scale = float(jnp.max(jnp.abs(ref))) + 1.0
    assert err < 5e-2 * scale, f"mismatch vs reference: max|diff|={err}, scale={scale}"

    print("KERNEL_OK")
</pallas_src>

<mosaic_0001>
module attributes {stable_mosaic.version = 11 : i64} {
  func.func @kernel(%arg0: i32, %arg1: memref<2x16x16x128xbf16, #tpu.memory_space<vmem>>, %arg2: memref<128x256xbf16, #tpu.memory_space<vmem>>, %arg3: memref<1x64xf32, #tpu.memory_space<vmem>>, %arg4: memref<2x16x16x64xbf16, #tpu.memory_space<vmem>>) attributes {dimension_semantics = [#tpu.dimension_semantics<parallel>], iteration_bounds = array<i64: 4>, scalar_prefetch = 0 : i64, scratch_operands = 0 : i64, tpu.core_type = #tpu.core_type<tc>, window_params = [{transform_indices = @transform_0, window_bounds = array<i64: 2, 16, 16, 128>}, {pipeline_mode = #tpu.pipeline_mode<synchronous>, transform_indices = @transform_1, window_bounds = array<i64: 128, 256>}, {pipeline_mode = #tpu.pipeline_mode<synchronous>, transform_indices = @transform_2, window_bounds = array<i64: 1, 64>}, {transform_indices = @transform_3, window_bounds = array<i64: 2, 16, 16, 64>}]} {
    %c0 = arith.constant 0 : index
    %c0_0 = arith.constant 0 : index
    %c0_1 = arith.constant 0 : index
    %c0_2 = arith.constant 0 : index
    %0 = vector.load %arg1[%c0, %c0_0, %c0_1, %c0_2] : memref<2x16x16x128xbf16, #tpu.memory_space<vmem>>, vector<2x16x16x128xbf16>
    %1 = vector.shape_cast %0 : vector<2x16x16x128xbf16> to vector<512x128xbf16>
    %c0_3 = arith.constant 0 : index
    %c0_4 = arith.constant 0 : index
    %2 = vector.load %arg2[%c0_3, %c0_4] : memref<128x256xbf16, #tpu.memory_space<vmem>>, vector<128x256xbf16>
    %cst = arith.constant dense<0.000000e+00> : vector<512x256xf32>
    %3 = tpu.matmul %1, %2, %cst {dimension_numbers = #tpu.dot_dimension_numbers<[1], [0], [0], [1], [0, 0, 1, 1], [], []>} : vector<512x128xbf16>, vector<128x256xbf16>, vector<512x256xf32> -> vector<512x256xf32>
    %4 = vector.extract_strided_slice %3 {offsets = [0, 0], sizes = [512, 64], strides = [1, 1]} : vector<512x256xf32> to vector<512x64xf32>
    %5 = vector.extract_strided_slice %3 {offsets = [0, 64], sizes = [512, 64], strides = [1, 1]} : vector<512x256xf32> to vector<512x64xf32>
    %6 = arith.maximumf %4, %5 : vector<512x64xf32>
    %7 = vector.extract_strided_slice %3 {offsets = [0, 128], sizes = [512, 64], strides = [1, 1]} : vector<512x256xf32> to vector<512x64xf32>
    %8 = arith.maximumf %6, %7 : vector<512x64xf32>
    %9 = vector.extract_strided_slice %3 {offsets = [0, 192], sizes = [512, 64], strides = [1, 1]} : vector<512x256xf32> to vector<512x64xf32>
    %10 = arith.maximumf %8, %9 : vector<512x64xf32>
    %c0_5 = arith.constant 0 : index
    %c0_6 = arith.constant 0 : index
    %11 = vector.load %arg3[%c0_5, %c0_6] : memref<1x64xf32, #tpu.memory_space<vmem>>, vector<1x64xf32>
    %12 = vector.broadcast %11 : vector<1x64xf32> to vector<512x64xf32>
    %13 = arith.addf %10, %12 : vector<512x64xf32>
    %cst_7 = arith.constant 0.000000e+00 : f32
    %14 = vector.broadcast %cst_7 : f32 to vector<512x64xf32>
    %15 = arith.maximumf %13, %14 : vector<512x64xf32>
    %16 = vector.shape_cast %15 : vector<512x64xf32> to vector<2x16x16x64xf32>
    %17 = arith.truncf %16 : vector<2x16x16x64xf32> to vector<2x16x16x64xbf16>
    %c0_8 = arith.constant 0 : index
    %c0_9 = arith.constant 0 : index
    %c0_10 = arith.constant 0 : index
    %c0_11 = arith.constant 0 : index
    %18 = vector.load %arg4[%c0_8, %c0_9, %c0_10, %c0_11] : memref<2x16x16x64xbf16, #tpu.memory_space<vmem>>, vector<2x16x16x64xbf16>
    tpu.vector_store %arg4[%c0_8, %c0_9, %c0_10, %c0_11], %17 {strides = array<i32>} : memref<2x16x16x64xbf16, #tpu.memory_space<vmem>>, vector<2x16x16x64xbf16>,
    return
  }
  func.func @transform_0(%arg0: i32) -> (i32, i32, i32, i32) {
    %c0_i32 = arith.constant 0 : i32
    %c0_i32_0 = arith.constant 0 : i32
    %c0_i32_1 = arith.constant 0 : i32
    %c0_i32_2 = arith.constant 0 : i32
    return %arg0, %c0_i32, %c0_i32_0, %c0_i32_1 : i32, i32, i32, i32
  }
  func.func @transform_1(%arg0: i32) -> (i32, i32) {
    %c0_i32 = arith.constant 0 : i32
    %c0_i32_0 = arith.constant 0 : i32
    %c0_i32_1 = arith.constant 0 : i32
    return %c0_i32, %c0_i32_0 : i32, i32
  }
  func.func @transform_2(%arg0: i32) -> (i32, i32) {
    %c0_i32 = arith.constant 0 : i32
    %c0_i32_0 = arith.constant 0 : i32
    %c0_i32_1 = arith.constant 0 : i32
    return %c0_i32, %c0_i32_0 : i32, i32
  }
  func.func @transform_3(%arg0: i32) -> (i32, i32, i32, i32) {
    %c0_i32 = arith.constant 0 : i32
    %c0_i32_0 = arith.constant 0 : i32
    %c0_i32_1 = arith.constant 0 : i32
    %c0_i32_2 = arith.constant 0 : i32
    return %arg0, %c0_i32, %c0_i32_0, %c0_i32_1 : i32, i32, i32, i32
  }
}

</mosaic_0001>

<llo_original>
// kernel: tpu_custom_call.1
$region0: #{tpu_custom_call.1}
  #allocation0 [shape = 'u32[]', space=smem, size = 0x4, offset = 0x4, fixed_abs, tag = 'smem constant byte address 0x4 - core index']
  #allocation1 [shape = 'u32[144,128]{1,0:T(1,128)}', space=vmem, size = 0x12000, scoped, tag = 'internal scratch']
  %s0 = inlined_call_operand.hbm [shape: bf16[8,16,16,128], index: 0, kind: input, shape index: {}]
  %s1 = inlined_call_operand.hbm [shape: bf16[128,256], index: 1, kind: input, shape index: {}]
  %s2 = inlined_call_operand.vmem [shape: f32[1,64], index: 2, kind: input, shape index: {}]
  %s3 = inlined_call_operand.hbm [shape: bf16[8,16,16,64], index: 3, kind: output, shape index: {}]
  %s4 = sld [smem:[#allocation0]]
  $region53: #{tpu_custom_call.1} parent=0
    _
  %s6 = ssub.s32 1, %s4
  %s7 = scalar_select 0, %s6, %s4
  $region1: #{tpu_custom_call.1} parent=0
    #allocation2 [shape = 'u8[262144]{0}', space=vmem, size = 0x40000, scoped, tag = 'input window, operand 0']
    #allocation3 [shape = 's32[2]{0}', space=sflag, size = 0x8, scoped, tag = 'scoped memory for tpu_custom_call.1']
    #allocation4 [shape = 's32[2]{0}', space=sflag, size = 0x8, scoped, tag = 'scoped memory for tpu_custom_call.1']
    #allocation5 [shape = 'u8[65536]{0}', space=vmem, size = 0x10000, scoped, tag = 'input window, operand 1, single buffered']
    #allocation6 [shape = 's32[1]{0}', space=sflag, size = 0x4, scoped, tag = 'scoped memory for tpu_custom_call.1']
    #allocation7 [shape = 'u8[262144]{0}', space=vmem, size = 0x40000, scoped, tag = 'output window, operand 0']
    %8 = vsyncpa [#allocation3], 0
    %s9 = scalar_lea.sflag [#allocation3], 1
    %10 = vsyncpa %s9, 0
    %11 = vsyncpa [#allocation6], 0
    %12 = vsyncpa [#allocation4], 0
    %s13 = scalar_lea.sflag [#allocation4], 1
    %14 = vsyncpa %s13, 0
    loop: start=0, step=1, limit=6
    $region2: #{tpu_custom_call.1} parent=1 // loop_pre_header
      _
    $region3: #{tpu_custom_call.1} parent=1 // loop_header
      %s16 = sphi 0, %s20
      %p17 = scmp.ge.s32.totalorder %s16, 6
      %s26 = sphi 0, %s28
      %s29 = sphi 0, %s26
      %s30 = sphi 0, %s29
      %s46 = sphi 0, %s30
      %s50 = sphi 0, %s50
      %s52 = sphi 0, %s50
      %s53 = sphi 0, %s52
      %s67 = sphi 0, %s53
      %s71 = sphi 0, %s71
      %s73 = sphi 0, %s71
      %s74 = sphi 0, %s73
      %s88 = sphi 0, %s74
      %s94 = sphi 0, %s96
      %s97 = sphi 0, %s94
      %s98 = sphi 0, %s97
      %s114 = sphi 0, %s98
    $region4: #{tpu_custom_call.1} parent=1 // loop_header_branch
      %19 = sbr.rel (%p17) target = $region8
    $region5: #{tpu_custom_call.1} parent=1 // loop_body
      %s21 = ssub.s32 %s16, 1
      %s22 = ssub.s32 %s16, 2
      %s23 = sadd.s32 %s16, 1
      %s24 = ssub.s32 %s16, %s23
      %p25 = scmp.eq.s32.totalorder %s24, 0
      %s27 = sadd.s32 %s26, 1
      %s28 = scalar_select %p25, %s26, %s27
      %p31 = pneg %p25
      %p32 = scmp.eq.s32.totalorder %s16, 3
      %p33 = por %p31, %p32
      %p34 = scmp.ne.s32.totalorder %s26, %s29
      %p35 = scmp.eq.s32.totalorder %s16, 0
      %p36 = por %p34, %p35
      %p37 = scmp.ne.s32.totalorder %s26, %s29
      %p38 = scmp.eq.s32.totalorder %s21, 3
      %p39 = por %p37, %p38
      %p40 = scmp.ne.s32.totalorder %s29, %s30
      %p41 = scmp.eq.s32.totalorder %s21, 0
      %p42 = por %p40, %p41
      %p43 = scmp.ne.s32.totalorder %s29, %s30
      %p44 = scmp.eq.s32.totalorder %s22, 3
      %p45 = por %p43, %p44
      %p47 = scmp.ne.s32.totalorder %s30, %s46
      %p48 = scmp.eq.s32.totalorder %s22, 0
      %p49 = por %p47, %p48
      %s51 = sadd.s32 %s50, 1
      %p54 = scmp.eq.s32.totalorder %s16, 3
      %p55 = scmp.ne.s32.totalorder %s50, %s52
      %p56 = scmp.eq.s32.totalorder %s16, 0
      %p57 = por %p55, %p56
      %p58 = scmp.ne.s32.totalorder %s50, %s52
      %p59 = scmp.eq.s32.totalorder %s21, 3
      %p60 = por %p58, %p59
      %p61 = scmp.ne.s32.totalorder %s52, %s53
      %p62 = scmp.eq.s32.totalorder %s21, 0
      %p63 = por %p61, %p62
      %p64 = scmp.ne.s32.totalorder %s52, %s53
      %p65 = scmp.eq.s32.totalorder %s22, 3
      %p66 = por %p64, %p65
      %p68 = scmp.ne.s32.totalorder %s53, %s67
      %p69 = scmp.eq.s32.totalorder %s22, 0
      %p70 = por %p68, %p69
      %s72 = sadd.s32 %s71, 1
      %p75 = scmp.eq.s32.totalorder %s16, 3
      %p76 = scmp.ne.s32.totalorder %s71, %s73
      %p77 = scmp.eq.s32.totalorder %s16, 0
      %p78 = por %p76, %p77
      %p79 = scmp.ne.s32.totalorder %s71, %s73
      %p80 = scmp.eq.s32.totalorder %s21, 3
      %p81 = por %p79, %p80
      %p82 = scmp.ne.s32.totalorder %s73, %s74
      %p83 = scmp.eq.s32.totalorder %s21, 0
      %p84 = por %p82, %p83
      %p85 = scmp.ne.s32.totalorder %s73, %s74
      %p86 = scmp.eq.s32.totalorder %s22, 3
      %p87 = por %p85, %p86
      %p89 = scmp.ne.s32.totalorder %s74, %s88
      %p90 = scmp.eq.s32.totalorder %s22, 0
      %p91 = por %p89, %p90
      %s92 = ssub.s32 %s16, %s23
      %p93 = scmp.eq.s32.totalorder %s92, 0
      %s95 = sadd.s32 %s94, 1
      %s96 = scalar_select %p93, %s94, %s95
      %p99 = pneg %p93
      %p100 = scmp.eq.s32.totalorder %s16, 3
      %p101 = por %p99, %p100
      %p102 = scmp.ne.s32.totalorder %s94, %s97
      %p103 = scmp.eq.s32.totalorder %s16, 0
      %p104 = por %p102, %p103
      %p105 = scmp.ne.s32.totalorder %s94, %s97
      %p106 = scmp.eq.s32.totalorder %s21, 3
      %p107 = por %p105, %p106
      %p108 = scmp.ne.s32.totalorder %s97, %s98
      %p109 = scmp.eq.s32.totalorder %s21, 0
      %p110 = por %p108, %p109
      %p111 = scmp.ne.s32.totalorder %s97, %s98
      %p112 = scmp.eq.s32.totalorder %s22, 3
      %p113 = por %p111, %p112
      %p115 = scmp.ne.s32.totalorder %s98, %s114
      %p116 = scmp.eq.s32.totalorder %s22, 0
      %p117 = por %p115, %p116
      %p118 = scmp.le.s32.totalorder 1, %s16
      %p119 = scmp.lt.s32.totalorder %s16, 5
      %p120 = pnand %p118, %p119
      %p121 = pneg %p120
      // Predicated region
      $region9: #{tpu_custom_call.1} parent=5 // pred_check
        _
      $region10: #{tpu_custom_call.1} parent=5 // pred_check_branch
        %123 = sbr.rel (%p120) target = $region12
      $region11: #{tpu_custom_call.1} parent=5 // pred_region
        %s124 = ssub.s32 %s16, 1
        // Predicated region
        $region13: #{tpu_custom_call.1} parent=11 // pred_check
          %p125 = pneg %p63
        $region14: #{tpu_custom_call.1} parent=11 // pred_check_branch
          %127 = sbr.rel (%p125) target = $region16
        $region15: #{tpu_custom_call.1} parent=11 // pred_region
          %s129 = ssub.s32 2048, 2048
          %130 = vsyncadd [#allocation6], %s129
          %s131 = sshll.u32 [#allocation5], 4
          %s132 = int_to_ptr.vmem [resolvable:$true] %s131
          %137 = dma.hbm_to_vmem [thread:$0]  %s1, 2048, %s132, [#allocation6], 128, 128, 8
        $region16: #{tpu_custom_call.1} parent=11 // pred_fallthru
          _
        // Predicated region
        $region17: #{tpu_custom_call.1} parent=11 // pred_check
          %p138 = pneg %p84
        $region18: #{tpu_custom_call.1} parent=11 // pred_check_branch
          %140 = sbr.rel (%p138) target = $region20
        $region19: #{tpu_custom_call.1} parent=11 // pred_region
          _
        $region20: #{tpu_custom_call.1} parent=11 // pred_fallthru
          _
      $region12: #{tpu_custom_call.1} parent=5 // pred_fallthru
        _
      %p141 = scmp.lt.s32.totalorder %s16, 4
      // Predicated region
      $region21: #{tpu_custom_call.1} parent=5 // pred_check
        %p142 = pneg %p141
      $region22: #{tpu_custom_call.1} parent=5 // pred_check_branch
        %144 = sbr.rel (%p142) target = $region24
      $region23: #{tpu_custom_call.1} parent=5 // pred_region
        // Predicated region
        $region25: #{tpu_custom_call.1} parent=23 // pred_check
          %p145 = pneg %p36
        $region26: #{tpu_custom_call.1} parent=23 // pred_check_branch
          %147 = sbr.rel (%p145) target = $region28
        $region27: #{tpu_custom_call.1} parent=23 // pred_region
          %s148 = sand.u32 %s26, 1
          %s149 = scalar_lea.sflag [#allocation3], %s148
          %s150 = sand.u32 %s26, 1
          %s151 = smul.addr %s150, 256
          %s152 = scalar_lea.vmem [#allocation2], %s151
          %s153 = smul.u32 2, %s16
          %s155 = ssub.s32 4096, 4096
          %156 = vsyncadd %s149, %s155
          %s157 = smul.addr %s153, 32
          %s158 = smul.addr %s157, 64
          %s159 = scalar_lea.hbm %s0, %s158
          %s160 = sshll.u32 %s152, 4
          %s161 = int_to_ptr.vmem [resolvable:$true] %s160
          %166 = dma.hbm_to_vmem [thread:$0]  %s159, 4096, %s161, %s149, 64, 64, 4
        $region28: #{tpu_custom_call.1} parent=23 // pred_fallthru
          _
      $region24: #{tpu_custom_call.1} parent=5 // pred_fallthru
        _
      %p167 = scmp.le.s32.totalorder 1, %s16
      %p168 = scmp.lt.s32.totalorder %s16, 5
      %p169 = pnand %p167, %p168
      %p170 = pneg %p169
      // Predicated region
      $region29: #{tpu_custom_call.1} parent=5 // pred_check
        _
      $region30: #{tpu_custom_call.1} parent=5 // pred_check_branch
        %172 = sbr.rel (%p169) target = $region32
      $region31: #{tpu_custom_call.1} parent=5 // pred_region
        %s173 = ssub.s32 %s16, 1
        %s174 = sand.u32 %s29, 1
        %s175 = scalar_lea.sflag [#allocation3], %s174
        %s176 = sand.u32 %s29, 1
        %s177 = smul.addr %s176, 256
        %s178 = scalar_lea.vmem [#allocation2], %s177
        // Predicated region
        $region33: #{tpu_custom_call.1} parent=31 // pred_check
          %p179 = pneg %p42
        $region34: #{tpu_custom_call.1} parent=31 // pred_check_branch
          %181 = sbr.rel (%p179) target = $region36
        $region35: #{tpu_custom_call.1} parent=31 // pred_region
          %182 = dma.done %s175, 4096
        $region36: #{tpu_custom_call.1} parent=31 // pred_fallthru
          _
        // Predicated region
        $region37: #{tpu_custom_call.1} parent=31 // pred_check
          %p183 = pneg %p63
        $region38: #{tpu_custom_call.1} parent=31 // pred_check_branch
          %185 = sbr.rel (%p183) target = $region40
        $region39: #{tpu_custom_call.1} parent=31 // pred_region
          %186 = dma.done [#allocation6], 2048
        $region40: #{tpu_custom_call.1} parent=31 // pred_fallthru
          _
        %s187 = sand.u32 %s29, 1
        %s188 = scalar_lea.sflag [#allocation3], %s187
        %s189 = sand.u32 %s29, 1
        %s190 = smul.addr %s189, 256
        %s191 = scalar_lea.vmem [#allocation2], %s190
        %p192 = pneg %p42
        %p193 = pneg %p39
        %p194 = pneg %p63
        %p195 = pneg %p60
        %p196 = pneg %p84
        %p197 = pneg %p81
        %p198 = pneg %p110
        %p199 = pneg %p107
        %s200 = sand.u32 %s97, 1
        %s201 = scalar_lea.sflag [#allocation4], %s200
        %s202 = sand.u32 %s97, 1
        %s203 = smul.addr %s202, 256
        %s204 = scalar_lea.vmem [#allocation7], %s203
        %s205 = smul.u32 2, %s21
        %s206 = smul.u32 2, %s21
        %v208 = vld [vmem:[%s178] sm:$0xf]
        %v209 = vld [vmem:[%s178 + $0x4] sm:$0xf]
        %v210 = vld [vmem:[%s178 + $0x8] sm:$0xf]
        %v211 = vld [vmem:[%s178 + $0xc] sm:$0xf]
        %v212 = vld [vmem:[%s178 + $0x10] sm:$0xf]
        %v213 = vld [vmem:[%s178 + $0x14] sm:$0xf]
        %v214 = vld [vmem:[%s178 + $0x18] sm:$0xf]
        %v215 = vld [vmem:[%s178 + $0x1c] sm:$0xf]
        %v216 = vld [vmem:[%s178 + $0x20] sm:$0xf]
        %v217 = vld [vmem:[%s178 + $0x24] sm:$0xf]
        %v218 = vld [vmem:[%s178 + $0x28] sm:$0xf]
        %v219 = vld [vmem:[%s178 + $0x2c] sm:$0xf]
        %v220 = vld [vmem:[%s178 + $0x30] sm:$0xf]
        %v221 = vld [vmem:[%s178 + $0x34] sm:$0xf]
        %v222 = vld [vmem:[%s178 + $0x38] sm:$0xf]
        %v223 = vld [vmem:[%s178 + $0x3c] sm:$0xf]
        %v224 = vld [vmem:[%s178 + $0x40] sm:$0xf]
        %v225 = vld [vmem:[%s178 + $0x44] sm:$0xf]
        %v226 = vld [vmem:[%s178 + $0x48] sm:$0xf]
        %v227 = vld [vmem:[%s178 + $0x4c] sm:$0xf]
        %v228 = vld [vmem:[%s178 + $0x50] sm:$0xf]
        %v229 = vld [vmem:[%s178 + $0x54] sm:$0xf]
        %v230 = vld [vmem:[%s178 + $0x58] sm:$0xf]
        %v231 = vld [vmem:[%s178 + $0x5c] sm:$0xf]
        %v232 = vld [vmem:[%s178 + $0x60] sm:$0xf]
        %v233 = vld [vmem:[%s178 + $0x64] sm:$0xf]
        %v234 = vld [vmem:[%s178 + $0x68] sm:$0xf]
        %v235 = vld [vmem:[%s178 + $0x6c] sm:$0xf]
        %v236 = vld [vmem:[%s178 + $0x70] sm:$0xf]
        %v237 = vld [vmem:[%s178 + $0x74] sm:$0xf]
        %v238 = vld [vmem:[%s178 + $0x78] sm:$0xf]
        %v239 = vld [vmem:[%s178 + $0x7c] sm:$0xf]
        %v240 = vld [vmem:[%s178 + $0x80] sm:$0xf]
        %v241 = vld [vmem:[%s178 + $0x84] sm:$0xf]
        %v242 = vld [vmem:[%s178 + $0x88] sm:$0xf]
        %v243 = vld [vmem:[%s178 + $0x8c] sm:$0xf]
        %v244 = vld [vmem:[%s178 + $0x90] sm:$0xf]
        %v245 = vld [vmem:[%s178 + $0x94] sm:$0xf]
        %v246 = vld [vmem:[%s178 + $0x98] sm:$0xf]
        %v247 = vld [vmem:[%s178 + $0x9c] sm:$0xf]
        %v248 = vld [vmem:[%s178 + $0xa0] sm:$0xf]
        %v249 = vld [vmem:[%s178 + $0xa4] sm:$0xf]
        %v250 = vld [vmem:[%s178 + $0xa8] sm:$0xf]
        %v251 = vld [vmem:[%s178 + $0xac] sm:$0xf]
        %v252 = vld [vmem:[%s178 + $0xb0] sm:$0xf]
        %v253 = vld [vmem:[%s178 + $0xb4] sm:$0xf]
        %v254 = vld [vmem:[%s178 + $0xb8] sm:$0xf]
        %v255 = vld [vmem:[%s178 + $0xbc] sm:$0xf]
        %v256 = vld [vmem:[%s178 + $0xc0] sm:$0xf]
        %v257 = vld [vmem:[%s178 + $0xc4] sm:$0xf]
        %v258 = vld [vmem:[%s178 + $0xc8] sm:$0xf]
        %v259 = vld [vmem:[%s178 + $0xcc] sm:$0xf]
        %v260 = vld [vmem:[%s178 + $0xd0] sm:$0xf]
        %v261 = vld [vmem:[%s178 + $0xd4] sm:$0xf]
        %v262 = vld [vmem:[%s178 + $0xd8] sm:$0xf]
        %v263 = vld [vmem:[%s178 + $0xdc] sm:$0xf]
        %v264 = vld [vmem:[%s178 + $0xe0] sm:$0xf]
        %v265 = vld [vmem:[%s178 + $0xe4] sm:$0xf]
        %v266 = vld [vmem:[%s178 + $0xe8] sm:$0xf]
        %v267 = vld [vmem:[%s178 + $0xec] sm:$0xf]
        %v268 = vld [vmem:[%s178 + $0xf0] sm:$0xf]
        %v269 = vld [vmem:[%s178 + $0xf4] sm:$0xf]
        %v270 = vld [vmem:[%s178 + $0xf8] sm:$0xf]
        %v271 = vld [vmem:[%s178 + $0xfc] sm:$0xf]
        %v272 = vld [vmem:[#allocation5] sm:$0xff]
        %v273 = vld [vmem:[#allocation5 + $0x8] sm:$0xff]
        %v274 = vld [vmem:[#allocation5 + $0x10] sm:$0xff]
        %v275 = vld [vmem:[#allocation5 + $0x18] sm:$0xff]
        %v276 = vld [vmem:[#allocation5 + $0x20] sm:$0xff]
        %v277 = vld [vmem:[#allocation5 + $0x28] sm:$0xff]
        %v278 = vld [vmem:[#allocation5 + $0x30] sm:$0xff]
        %v279 = vld [vmem:[#allocation5 + $0x38] sm:$0xff]
        %v280 = vld [vmem:[#allocation5 + $0x40] sm:$0xff]
        %v281 = vld [vmem:[#allocation5 + $0x48] sm:$0xff]
        %v282 = vld [vmem:[#allocation5 + $0x50] sm:$0xff]
        %v283 = vld [vmem:[#allocation5 + $0x58] sm:$0xff]
        %v284 = vld [vmem:[#allocation5 + $0x60] sm:$0xff]
        %v285 = vld [vmem:[#allocation5 + $0x68] sm:$0xff]
        %v286 = vld [vmem:[#allocation5 + $0x70] sm:$0xff]
        %v287 = vld [vmem:[#allocation5 + $0x78] sm:$0xff]
        %v352 = vunpack.c.l.b16 %v208
        %v353 = vunpack.c.l.b16 %v209
        %v354 = vunpack.c.l.b16 %v210
        %v355 = vunpack.c.l.b16 %v211
        %v356 = vunpack.c.l.b16 %v212
        %v357 = vunpack.c.l.b16 %v213
        %v358 = vunpack.c.l.b16 %v214
        %v359 = vunpack.c.l.b16 %v215
        %v360 = vunpack.c.l.b16 %v216
        %v361 = vunpack.c.l.b16 %v217
        %v362 = vunpack.c.l.b16 %v218
        %v363 = vunpack.c.l.b16 %v219
        %v364 = vunpack.c.l.b16 %v220
        %v365 = vunpack.c.l.b16 %v221
        %v366 = vunpack.c.l.b16 %v222
        %v367 = vunpack.c.l.b16 %v223
        %v368 = vunpack.c.l.b16 %v224
        %v369 = vunpack.c.l.b16 %v225
        %v370 = vunpack.c.l.b16 %v226
        %v371 = vunpack.c.l.b16 %v227
        %v372 = vunpack.c.l.b16 %v228
        %v373 = vunpack.c.l.b16 %v229
        %v374 = vunpack.c.l.b16 %v230
        %v375 = vunpack.c.l.b16 %v231
        %v376 = vunpack.c.l.b16 %v232
        %v377 = vunpack.c.l.b16 %v233
        %v378 = vunpack.c.l.b16 %v234
        %v379 = vunpack.c.l.b16 %v235
        %v380 = vunpack.c.l.b16 %v236
        %v381 = vunpack.c.l.b16 %v237
        %v382 = vunpack.c.l.b16 %v238
        %v383 = vunpack.c.l.b16 %v239
        %v384 = vunpack.c.l.b16 %v240
        %v385 = vunpack.c.l.b16 %v241
        %v386 = vunpack.c.l.b16 %v242
        %v387 = vunpack.c.l.b16 %v243
        %v388 = vunpack.c.l.b16 %v244
        %v389 = vunpack.c.l.b16 %v245
        %v390 = vunpack.c.l.b16 %v246
        %v391 = vunpack.c.l.b16 %v247
        %v392 = vunpack.c.l.b16 %v248
        %v393 = vunpack.c.l.b16 %v249
        %v394 = vunpack.c.l.b16 %v250
        %v395 = vunpack.c.l.b16 %v251
        %v396 = vunpack.c.l.b16 %v252
        %v397 = vunpack.c.l.b16 %v253
        %v398 = vunpack.c.l.b16 %v254
        %v399 = vunpack.c.l.b16 %v255
        %v400 = vunpack.c.l.b16 %v256
        %v401 = vunpack.c.l.b16 %v257
        %v402 = vunpack.c.l.b16 %v258
        %v403 = vunpack.c.l.b16 %v259
        %v404 = vunpack.c.l.b16 %v260
        %v405 = vunpack.c.l.b16 %v261
        %v406 = vunpack.c.l.b16 %v262
        %v407 = vunpack.c.l.b16 %v263
        %v408 = vunpack.c.l.b16 %v264
        %v409 = vunpack.c.l.b16 %v265
        %v410 = vunpack.c.l.b16 %v266
        %v411 = vunpack.c.l.b16 %v267
        %v412 = vunpack.c.l.b16 %v268
        %v413 = vunpack.c.l.b16 %v269
        %v414 = vunpack.c.l.b16 %v270
        %v415 = vunpack.c.l.b16 %v271
        %v416 = vpack.c.b16 %v353, %v352
        %v417 = vpack.c.b16 %v355, %v354
        %v418 = vpack.c.b16 %v357, %v356
        %v419 = vpack.c.b16 %v359, %v358
        %v420 = vpack.c.b16 %v361, %v360
        %v421 = vpack.c.b16 %v363, %v362
        %v422 = vpack.c.b16 %v365, %v364
        %v423 = vpack.c.b16 %v367, %v366
        %v424 = vpack.c.b16 %v369, %v368
        %v425 = vpack.c.b16 %v371, %v370
        %v426 = vpack.c.b16 %v373, %v372
        %v427 = vpack.c.b16 %v375, %v374
        %v428 = vpack.c.b16 %v377, %v376
        %v429 = vpack.c.b16 %v379, %v378
        %v430 = vpack.c.b16 %v381, %v380
        %v431 = vpack.c.b16 %v383, %v382
        %v432 = vpack.c.b16 %v385, %v384
        %v433 = vpack.c.b16 %v387, %v386
        %v434 = vpack.c.b16 %v389, %v388
        %v435 = vpack.c.b16 %v391, %v390
        %v436 = vpack.c.b16 %v393, %v392
        %v437 = vpack.c.b16 %v395, %v394
        %v438 = vpack.c.b16 %v397, %v396
        %v439 = vpack.c.b16 %v399, %v398
        %v440 = vpack.c.b16 %v401, %v400
        %v441 = vpack.c.b16 %v403, %v402
        %v442 = vpack.c.b16 %v405, %v404
        %v443 = vpack.c.b16 %v407, %v406
        %v444 = vpack.c.b16 %v409, %v408
        %v445 = vpack.c.b16 %v411, %v410
        %v446 = vpack.c.b16 %v413, %v412
        %v447 = vpack.c.b16 %v415, %v414
        %v496 = vunpack.c.l.b16 %v272
        %v497 = vunpack.c.h.b16 %v272
        %v498 = vunpack.c.l.b16 %v273
        %v499 = vunpack.c.h.b16 %v273
        %v500 = vunpack.c.l.b16 %v274
        %v501 = vunpack.c.h.b16 %v274
        %v502 = vunpack.c.l.b16 %v275
        %v503 = vunpack.c.h.b16 %v275
        %v504 = vunpack.c.l.b16 %v276
        %v505 = vunpack.c.h.b16 %v276
        %v506 = vunpack.c.l.b16 %v277
        %v507 = vunpack.c.h.b16 %v277
        %v508 = vunpack.c.l.b16 %v278
        %v509 = vunpack.c.h.b16 %v278
        %v510 = vunpack.c.l.b16 %v279
        %v511 = vunpack.c.h.b16 %v279
        %v512 = vunpack.c.l.b16 %v280
        %v513 = vunpack.c.h.b16 %v280
        %v514 = vunpack.c.l.b16 %v281
        %v515 = vunpack.c.h.b16 %v281
        %v516 = vunpack.c.l.b16 %v282
        %v517 = vunpack.c.h.b16 %v282
        %v518 = vunpack.c.l.b16 %v283
        %v519 = vunpack.c.h.b16 %v283
        %v520 = vunpack.c.l.b16 %v284
        %v521 = vunpack.c.h.b16 %v284
        %v522 = vunpack.c.l.b16 %v285
        %v523 = vunpack.c.h.b16 %v285
        %v524 = vunpack.c.l.b16 %v286
        %v525 = vunpack.c.h.b16 %v286
        %v526 = vunpack.c.l.b16 %v287
        %v527 = vunpack.c.h.b16 %v287
        %v528 = vpack.c.b16 %v498, %v496
        %v529 = vpack.c.b16 %v499, %v497
        %v530 = vpack.c.b16 %v502, %v500
        %v531 = vpack.c.b16 %v503, %v501
        %v532 = vpack.c.b16 %v506, %v504
        %v533 = vpack.c.b16 %v507, %v505
        %v534 = vpack.c.b16 %v510, %v508
        %v535 = vpack.c.b16 %v511, %v509
        %v536 = vpack.c.b16 %v514, %v512
        %v537 = vpack.c.b16 %v515, %v513
        %v538 = vpack.c.b16 %v518, %v516
        %v539 = vpack.c.b16 %v519, %v517
        %v540 = vpack.c.b16 %v522, %v520
        %v541 = vpack.c.b16 %v523, %v521
        %v542 = vpack.c.b16 %v526, %v524
        %v543 = vpack.c.b16 %v527, %v525
        %560 = vmatprep.subr.bf16.mxu0 %v529
        %561 = vmatpush1.bf16.msra.mxu0 %v528
        %562 = vmatprep.subr.bf16.mxu0 %v531
        %563 = vmatpush1.bf16.msra.mxu0 %v530
        %564 = vmatprep.subr.bf16.mxu0 %v533
        %565 = vmatpush1.bf16.msra.mxu0 %v532
        %566 = vmatprep.subr.bf16.mxu0 %v535
        %567 = vmatpush1.bf16.msra.mxu0 %v534
        %568 = vmatprep.subr.bf16.mxu0 %v537
        %569 = vmatpush1.bf16.msra.mxu0 %v536
        %570 = vmatprep.subr.bf16.mxu0 %v539
        %571 = vmatpush1.bf16.msra.mxu0 %v538
        %572 = vmatprep.subr.bf16.mxu0 %v541
        %573 = vmatpush1.bf16.msra.mxu0 %v540
        %574 = vmatprep.subr.bf16.mxu0 %v543
        %575 = vmatpush1.bf16.msra.mxu0 %v542
        %576 = vmatprep.subr.bf16.mxu0 0
        %577 = vmatpush1.bf16.msra.mxu0 0
        %578 = vmatprep.subr.bf16.mxu0 0
        %579 = vmatpush1.bf16.msra.mxu0 0
        %580 = vmatprep.subr.bf16.mxu0 0
        %581 = vmatpush1.bf16.msra.mxu0 0
        %582 = vmatprep.subr.bf16.mxu0 0
        %583 = vmatpush1.bf16.msra.mxu0 0
        %584 = vmatprep.subr.bf16.mxu0 0
        %585 = vmatpush1.bf16.msra.mxu0 0
        %586 = vmatprep.subr.bf16.mxu0 0
        %587 = vmatpush1.bf16.msra.mxu0 0
        %588 = vmatprep.subr.bf16.mxu0 0
        %589 = vmatpush1.bf16.msra.mxu0 0
        %590 = vmatprep.subr.bf16.mxu0 0
        %591 = vmatpush1.bf16.msra.mxu0 0
        %592 = vmatprep.mubr.bf16.mxu0 0
        %593 = vmatmul.mubr.bf16.gmra.mrb[0].mxu0 %v416
        %v594 = vpop.f32.mrb[0].mxu0
        %v595 = vadd.f32 0.0, %v594
        %v596 = vpop.f32.mrb[0].mxu0
        %v597 = vadd.f32 0.0, %v596
        %v598 = vpop.f32.mrb[0].mxu0
        %v599 = vadd.f32 0.0, %v598
        %v600 = vpop.f32.mrb[0].mxu0
        %v601 = vadd.f32 0.0, %v600
        %602 = vmatprep.mubr.bf16.mxu0 0
        %603 = vmatmul.mubr.bf16.gmra.mrb[0].mxu0 %v417
        %v604 = vpop.f32.mrb[0].mxu0
        %v605 = vadd.f32 0.0, %v604
        %v606 = vpop.f32.mrb[0].mxu0
        %v607 = vadd.f32 0.0, %v606
        %v608 = vpop.f32.mrb[0].mxu0
        %v609 = vadd.f32 0.0, %v608
        %v610 = vpop.f32.mrb[0].mxu0
        %v611 = vadd.f32 0.0, %v610
        %612 = vmatprep.mubr.bf16.mxu0 0
        %613 = vmatmul.mubr.bf16.gmra.mrb[0].mxu0 %v418
        %v614 = vpop.f32.mrb[0].mxu0
        %v615 = vadd.f32 0.0, %v614
        %v616 = vpop.f32.mrb[0].mxu0
        %v617 = vadd.f32 0.0, %v616
        %v618 = vpop.f32.mrb[0].mxu0
        %v619 = vadd.f32 0.0, %v618
        %v620 = vpop.f32.mrb[0].mxu0
        %v621 = vadd.f32 0.0, %v620
        %622 = vmatprep.mubr.bf16.mxu0 0
        %623 = vmatmul.mubr.bf16.gmra.mrb[0].mxu0 %v419
        %v624 = vpop.f32.mrb[0].mxu0
        %v625 = vadd.f32 0.0, %v624
        %v626 = vpop.f32.mrb[0].mxu0
        %v627 = vadd.f32 0.0, %v626
        %v628 = vpop.f32.mrb[0].mxu0
        %v629 = vadd.f32 0.0, %v628
        %v630 = vpop.f32.mrb[0].mxu0
        %v631 = vadd.f32 0.0, %v630
        %632 = vmatprep.mubr.bf16.mxu0 0
        %633 = vmatmul.mubr.bf16.gmra.mrb[0].mxu0 %v420
        %v634 = vpop.f32.mrb[0].mxu0
        %v635 = vadd.f32 0.0, %v634
        %v636 = vpop.f32.mrb[0].mxu0
        %v637 = vadd.f32 0.0, %v636
        %v638 = vpop.f32.mrb[0].mxu0
        %v639 = vadd.f32 0.0, %v638
        %v640 = vpop.f32.mrb[0].mxu0
        %v641 = vadd.f32 0.0, %v640
        %642 = vmatprep.mubr.bf16.mxu0 0
        %643 = vmatmul.mubr.bf16.gmra.mrb[0].mxu0 %v421
        %v644 = vpop.f32.mrb[0].mxu0
        %v645 = vadd.f32 0.0, %v644
        %v646 = vpop.f32.mrb[0].mxu0
        %v647 = vadd.f32 0.0, %v646
        %v648 = vpop.f32.mrb[0].mxu0
        %v649 = vadd.f32 0.0, %v648
        %v650 = vpop.f32.mrb[0].mxu0
        %v651 = vadd.f32 0.0, %v650
        %652 = vmatprep.mubr.bf16.mxu0 0
        %653 = vmatmul.mubr.bf16.gmra.mrb[0].mxu0 %v422
        %v654 = vpop.f32.mrb[0].mxu0
        %v655 = vadd.f32 0.0, %v654
        %v656 = vpop.f32.mrb[0].mxu0
        %v657 = vadd.f32 0.0, %v656
        %v658 = vpop.f32.mrb[0].mxu0
        %v659 = vadd.f32 0.0, %v658
        %v660 = vpop.f32.mrb[0].mxu0
        %v661 = vadd.f32 0.0, %v660
        %662 = vmatprep.mubr.bf16.mxu0 0
        %663 = vmatmul.mubr.bf16.gmra.mrb[0].mxu0 %v423
        %v664 = vpop.f32.mrb[0].mxu0
        %v665 = vadd.f32 0.0, %v664
        %v666 = vpop.f32.mrb[0].mxu0
        %v667 = vadd.f32 0.0, %v666
        %v668 = vpop.f32.mrb[0].mxu0
        %v669 = vadd.f32 0.0, %v668
        %v670 = vpop.f32.mrb[0].mxu0
        %v671 = vadd.f32 0.0, %v670
        %672 = vmatprep.mubr.bf16.mxu0 0
        %673 = vmatmul.mubr.bf16.gmra.mrb[0].mxu0 %v424
        %v674 = vpop.f32.mrb[0].mxu0
        %v675 = vadd.f32 0.0, %v674
        %v676 = vpop.f32.mrb[0].mxu0
        %v677 = vadd.f32 0.0, %v676
        %v678 = vpop.f32.mrb[0].mxu0
        %v679 = vadd.f32 0.0, %v678
        %v680 = vpop.f32.mrb[0].mxu0
        %v681 = vadd.f32 0.0, %v680
        %682 = vmatprep.mubr.bf16.mxu0 0
        %683 = vmatmul.mubr.bf16.gmra.mrb[0].mxu0 %v425
        %v684 = vpop.f32.mrb[0].mxu0
        %v685 = vadd.f32 0.0, %v684
        %v686 = vpop.f32.mrb[0].mxu0
        %v687 = vadd.f32 0.0, %v686
        %v688 = vpop.f32.mrb[0].mxu0
        %v689 = vadd.f32 0.0, %v688
        %v690 = vpop.f32.mrb[0].mxu0
        %v691 = vadd.f32 0.0, %v690
        %692 = vmatprep.mubr.bf16.mxu0 0
        %693 = vmatmul.mubr.bf16.gmra.mrb[0].mxu0 %v426
        %v694 = vpop.f32.mrb[0].mxu0
        %v695 = vadd.f32 0.0, %v694
        %v696 = vpop.f32.mrb[0].mxu0
        %v697 = vadd.f32 0.0, %v696
        %v698 = vpop.f32.mrb[0].mxu0
        %v699 = vadd.f32 0.0, %v698
        %v700 = vpop.f32.mrb[0].mxu0
        %v701 = vadd.f32 0.0, %v700
        %702 = vmatprep.mubr.bf16.mxu0 0
        %703 = vmatmul.mubr.bf16.gmra.mrb[0].mxu0 %v427
        %v704 = vpop.f32.mrb[0].mxu0
        %v705 = vadd.f32 0.0, %v704
        %v706 = vpop.f32.mrb[0].mxu0
        %v707 = vadd.f32 0.0, %v706
        %v708 = vpop.f32.mrb[0].mxu0
        %v709 = vadd.f32 0.0, %v708
        %v710 = vpop.f32.mrb[0].mxu0
        %v711 = vadd.f32 0.0, %v710
        %712 = vmatprep.mubr.bf16.mxu0 0
        %713 = vmatmul.mubr.bf16.gmra.mrb[0].mxu0 %v428
        %v714 = vpop.f32.mrb[0].mxu0
        %v715 = vadd.f32 0.0, %v714
        %v716 = vpop.f32.mrb[0].mxu0
        %v717 = vadd.f32 0.0, %v716
        %v718 = vpop.f32.mrb[0].mxu0
        %v719 = vadd.f32 0.0, %v718
        %v720 = vpop.f32.mrb[0].mxu0
        %v721 = vadd.f32 0.0, %v720
        %722 = vmatprep.mubr.bf16.mxu0 0
        %723 = vmatmul.mubr.bf16.gmra.mrb[0].mxu0 %v429
        %v724 = vpop.f32.mrb[0].mxu0
        %v725 = vadd.f32 0.0, %v724
        %v726 = vpop.f32.mrb[0].mxu0
        %v727 = vadd.f32 0.0, %v726
        %v728 = vpop.f32.mrb[0].mxu0
        %v729 = vadd.f32 0.0, %v728
        %v730 = vpop.f32.mrb[0].mxu0
        %v731 = vadd.f32 0.0, %v730
        %732 = vmatprep.mubr.bf16.mxu0 0
        %733 = vmatmul.mubr.bf16.gmra.mrb[0].mxu0 %v430
        %v734 = vpop.f32.mrb[0].mxu0
        %v735 = vadd.f32 0.0, %v734
        %v736 = vpop.f32.mrb[0].mxu0
        %v737 = vadd.f32 0.0, %v736
        %v738 = vpop.f32.mrb[0].mxu0
        %v739 = vadd.f32 0.0, %v738
        %v740 = vpop.f32.mrb[0].mxu0
        %v741 = vadd.f32 0.0, %v740
        %742 = vmatprep.mubr.bf16.mxu0 0
        %743 = vmatmul.mubr.bf16.gmra.mrb[0].mxu0 %v431
        %v744 = vpop.f32.mrb[0].mxu0
        %v745 = vadd.f32 0.0, %v744
        %v746 = vpop.f32.mrb[0].mxu0
        %v747 = vadd.f32 0.0, %v746
        %v748 = vpop.f32.mrb[0].mxu0
        %v749 = vadd.f32 0.0, %v748
        %v750 = vpop.f32.mrb[0].mxu0
        %v751 = vadd.f32 0.0, %v750
        %752 = vmatprep.mubr.bf16.mxu0 0
        %753 = vmatmul.mubr.bf16.gmra.mrb[0].mxu0 %v432
        %v754 = vpop.f32.mrb[0].mxu0
        %v755 = vadd.f32 0.0, %v754
        %v756 = vpop.f32.mrb[0].mxu0
        %v757 = vadd.f32 0.0, %v756
        %v758 = vpop.f32.mrb[0].mxu0
        %v759 = vadd.f32 0.0, %v758
        %v760 = vpop.f32.mrb[0].mxu0
        %v761 = vadd.f32 0.0, %v760
        %762 = vmatprep.mubr.bf16.mxu0 0
        %763 = vmatmul.mubr.bf16.gmra.mrb[0].mxu0 %v433
        %v764 = vpop.f32.mrb[0].mxu0
        %v765 = vadd.f32 0.0, %v764
        %v766 = vpop.f32.mrb[0].mxu0
        %v767 = vadd.f32 0.0, %v766
        %v768 = vpop.f32.mrb[0].mxu0
        %v769 = vadd.f32 0.0, %v768
        %v770 = vpop.f32.mrb[0].mxu0
        %v771 = vadd.f32 0.0, %v770
        %772 = vmatprep.mubr.bf16.mxu0 0
        %773 = vmatmul.mubr.bf16.gmra.mrb[0].mxu0 %v434
        %v774 = vpop.f32.mrb[0].mxu0
        %v775 = vadd.f32 0.0, %v774
        %v776 = vpop.f32.mrb[0].mxu0
        %v777 = vadd.f32 0.0, %v776
        %v778 = vpop.f32.mrb[0].mxu0
        %v779 = vadd.f32 0.0, %v778
        %v780 = vpop.f32.mrb[0].mxu0
        %v781 = vadd.f32 0.0, %v780
        %782 = vmatprep.mubr.bf16.mxu0 0
        %783 = vmatmul.mubr.bf16.gmra.mrb[0].mxu0 %v435
        %v784 = vpop.f32.mrb[0].mxu0
        %v785 = vadd.f32 0.0, %v784
        %v786 = vpop.f32.mrb[0].mxu0
        %v787 = vadd.f32 0.0, %v786
        %v788 = vpop.f32.mrb[0].mxu0
        %v789 = vadd.f32 0.0, %v788
        %v790 = vpop.f32.mrb[0].mxu0
        %v791 = vadd.f32 0.0, %v790
        %792 = vmatprep.mubr.bf16.mxu0 0
        %793 = vmatmul.mubr.bf16.gmra.mrb[0].mxu0 %v436
        %v794 = vpop.f32.mrb[0].mxu0
        %v795 = vadd.f32 0.0, %v794
        %v796 = vpop.f32.mrb[0].mxu0
        %v797 = vadd.f32 0.0, %v796
        %v798 = vpop.f32.mrb[0].mxu0
        %v799 = vadd.f32 0.0, %v798
        %v800 = vpop.f32.mrb[0].mxu0
        %v801 = vadd.f32 0.0, %v800
        %802 = vmatprep.mubr.bf16.mxu0 0
        %803 = vmatmul.mubr.bf16.gmra.mrb[0].mxu0 %v437
        %v804 = vpop.f32.mrb[0].mxu0
        %v805 = vadd.f32 0.0, %v804
        %v806 = vpop.f32.mrb[0].mxu0
        %v807 = vadd.f32 0.0, %v806
        %v808 = vpop.f32.mrb[0].mxu0
        %v809 = vadd.f32 0.0, %v808
        %v810 = vpop.f32.mrb[0].mxu0
        %v811 = vadd.f32 0.0, %v810
        %812 = vmatprep.mubr.bf16.mxu0 0
        %813 = vmatmul.mubr.bf16.gmra.mrb[0].mxu0 %v438
        %v814 = vpop.f32.mrb[0].mxu0
        %v815 = vadd.f32 0.0, %v814
        %v816 = vpop.f32.mrb[0].mxu0
        %v817 = vadd.f32 0.0, %v816
        %v818 = vpop.f32.mrb[0].mxu0
        %v819 = vadd.f32 0.0, %v818
        %v820 = vpop.f32.mrb[0].mxu0
        %v821 = vadd.f32 0.0, %v820
        %822 = vmatprep.mubr.bf16.mxu0 0
        %823 = vmatmul.mubr.bf16.gmra.mrb[0].mxu0 %v439
        %v824 = vpop.f32.mrb[0].mxu0
        %v825 = vadd.f32 0.0, %v824
        %v826 = vpop.f32.mrb[0].mxu0
        %v827 = vadd.f32 0.0, %v826
        %v828 = vpop.f32.mrb[0].mxu0
        %v829 = vadd.f32 0.0, %v828
        %v830 = vpop.f32.mrb[0].mxu0
        %v831 = vadd.f32 0.0, %v830
        %832 = vmatprep.mubr.bf16.mxu0 0
        %833 = vmatmul.mubr.bf16.gmra.mrb[0].mxu0 %v440
        %v834 = vpop.f32.mrb[0].mxu0
        %v835 = vadd.f32 0.0, %v834
        %v836 = vpop.f32.mrb[0].mxu0
        %v837 = vadd.f32 0.0, %v836
        %v838 = vpop.f32.mrb[0].mxu0
        %v839 = vadd.f32 0.0, %v838
        %v840 = vpop.f32.mrb[0].mxu0
        %v841 = vadd.f32 0.0, %v840
        %842 = vmatprep.mubr.bf16.mxu0 0
        %843 = vmatmul.mubr.bf16.gmra.mrb[0].mxu0 %v441
        %v844 = vpop.f32.mrb[0].mxu0
        %v845 = vadd.f32 0.0, %v844
        %v846 = vpop.f32.mrb[0].mxu0
        %v847 = vadd.f32 0.0, %v846
        %v848 = vpop.f32.mrb[0].mxu0
        %v849 = vadd.f32 0.0, %v848
        %v850 = vpop.f32.mrb[0].mxu0
        %v851 = vadd.f32 0.0, %v850
        %852 = vmatprep.mubr.bf16.mxu0 0
        %853 = vmatmul.mubr.bf16.gmra.mrb[0].mxu0 %v442
        %v854 = vpop.f32.mrb[0].mxu0
        %v855 = vadd.f32 0.0, %v854
        %v856 = vpop.f32.mrb[0].mxu0
        %v857 = vadd.f32 0.0, %v856
        %v858 = vpop.f32.mrb[0].mxu0
        %v859 = vadd.f32 0.0, %v858
        %v860 = vpop.f32.mrb[0].mxu0
        %v861 = vadd.f32 0.0, %v860
        %862 = vmatprep.mubr.bf16.mxu0 0
        %863 = vmatmul.mubr.bf16.gmra.mrb[0].mxu0 %v443
        %v864 = vpop.f32.mrb[0].mxu0
        %v865 = vadd.f32 0.0, %v864
        %v866 = vpop.f32.mrb[0].mxu0
        %v867 = vadd.f32 0.0, %v866
        %v868 = vpop.f32.mrb[0].mxu0
        %v869 = vadd.f32 0.0, %v868
        %v870 = vpop.f32.mrb[0].mxu0
        %v871 = vadd.f32 0.0, %v870
        %872 = vmatprep.mubr.bf16.mxu0 0
        %873 = vmatmul.mubr.bf16.gmra.mrb[0].mxu0 %v444
        %v874 = vpop.f32.mrb[0].mxu0
        %v875 = vadd.f32 0.0, %v874
        %v876 = vpop.f32.mrb[0].mxu0
        %v877 = vadd.f32 0.0, %v876
        %v878 = vpop.f32.mrb[0].mxu0
        %v879 = vadd.f32 0.0, %v878
        %v880 = vpop.f32.mrb[0].mxu0
        %v881 = vadd.f32 0.0, %v880
        %882 = vmatprep.mubr.bf16.mxu0 0
        %883 = vmatmul.mubr.bf16.gmra.mrb[0].mxu0 %v445
        %v884 = vpop.f32.mrb[0].mxu0
        %v885 = vadd.f32 0.0, %v884
        %v886 = vpop.f32.mrb[0].mxu0
        %v887 = vadd.f32 0.0, %v886
        %v888 = vpop.f32.mrb[0].mxu0
        %v889 = vadd.f32 0.0, %v888
        %v890 = vpop.f32.mrb[0].mxu0
        %v891 = vadd.f32 0.0, %v890
        %892 = vmatprep.mubr.bf16.mxu0 0
        %893 = vmatmul.mubr.bf16.gmra.mrb[0].mxu0 %v446
        %v894 = vpop.f32.mrb[0].mxu0
        %v895 = vadd.f32 0.0, %v894
        %v896 = vpop.f32.mrb[0].mxu0
        %v897 = vadd.f32 0.0, %v896
        %v898 = vpop.f32.mrb[0].mxu0
        %v899 = vadd.f32 0.0, %v898
        %v900 = vpop.f32.mrb[0].mxu0
        %v901 = vadd.f32 0.0, %v900
        %902 = vmatprep.mubr.bf16.mxu0 0
        %903 = vmatmul.mubr.bf16.gmra.mrb[0].mxu0 %v447
        %v904 = vpop.f32.mrb[0].mxu0
        %v905 = vadd.f32 0.0, %v904
        %v906 = vpop.f32.mrb[0].mxu0
        %v907 = vadd.f32 0.0, %v906
        %v908 = vpop.f32.mrb[0].mxu0
        %v909 = vadd.f32 0.0, %v908
        %v910 = vpop.f32.mrb[0].mxu0
        %v911 = vadd.f32 0.0, %v910
        %912 = vdwg.mxu0
        %977 = vrot.lane.b32.xlu0 %v595, 64
        %v978 = vpop.permute.xlu0 %977
        %979 = vrot.lane.b32.xlu0 %v599, 64
        %v980 = vpop.permute.xlu0 %979
        %981 = vrot.lane.b32.xlu0 %v605, 64
        %v982 = vpop.permute.xlu0 %981
        %983 = vrot.lane.b32.xlu0 %v609, 64
        %v984 = vpop.permute.xlu0 %983
        %985 = vrot.lane.b32.xlu0 %v615, 64
        %v986 = vpop.permute.xlu0 %985
        %987 = vrot.lane.b32.xlu0 %v619, 64
        %v988 = vpop.permute.xlu0 %987
        %989 = vrot.lane.b32.xlu0 %v625, 64
        %v990 = vpop.permute.xlu0 %989
        %991 = vrot.lane.b32.xlu0 %v629, 64
        %v992 = vpop.permute.xlu0 %991
        %993 = vrot.lane.b32.xlu0 %v635, 64
        %v994 = vpop.permute.xlu0 %993
        %995 = vrot.lane.b32.xlu0 %v639, 64
        %v996 = vpop.permute.xlu0 %995
        %997 = vrot.lane.b32.xlu0 %v645, 64
        %v998 = vpop.permute.xlu0 %997
        %999 = vrot.lane.b32.xlu0 %v649, 64
        %v1000 = vpop.permute.xlu0 %999
        %1001 = vrot.lane.b32.xlu0 %v655, 64
        %v1002 = vpop.permute.xlu0 %1001
        %1003 = vrot.lane.b32.xlu0 %v659, 64
        %v1004 = vpop.permute.xlu0 %1003
        %1005 = vrot.lane.b32.xlu0 %v665, 64
        %v1006 = vpop.permute.xlu0 %1005
        %1007 = vrot.lane.b32.xlu0 %v669, 64
        %v1008 = vpop.permute.xlu0 %1007
        %1009 = vrot.lane.b32.xlu0 %v675, 64
        %v1010 = vpop.permute.xlu0 %1009
        %1011 = vrot.lane.b32.xlu0 %v679, 64
        %v1012 = vpop.permute.xlu0 %1011
        %1013 = vrot.lane.b32.xlu0 %v685, 64
        %v1014 = vpop.permute.xlu0 %1013
        %1015 = vrot.lane.b32.xlu0 %v689, 64
        %v1016 = vpop.permute.xlu0 %1015
        %1017 = vrot.lane.b32.xlu0 %v695, 64
        %v1018 = vpop.permute.xlu0 %1017
        %1019 = vrot.lane.b32.xlu0 %v699, 64
        %v1020 = vpop.permute.xlu0 %1019
        %1021 = vrot.lane.b32.xlu0 %v705, 64
        %v1022 = vpop.permute.xlu0 %1021
        %1023 = vrot.lane.b32.xlu0 %v709, 64
        %v1024 = vpop.permute.xlu0 %1023
        %1025 = vrot.lane.b32.xlu0 %v715, 64
        %v1026 = vpop.permute.xlu0 %1025
        %1027 = vrot.lane.b32.xlu0 %v719, 64
        %v1028 = vpop.permute.xlu0 %1027
        %1029 = vrot.lane.b32.xlu0 %v725, 64
        %v1030 = vpop.permute.xlu0 %1029
        %1031 = vrot.lane.b32.xlu0 %v729, 64
        %v1032 = vpop.permute.xlu0 %1031
        %1033 = vrot.lane.b32.xlu0 %v735, 64
        %v1034 = vpop.permute.xlu0 %1033
        %1035 = vrot.lane.b32.xlu0 %v739, 64
        %v1036 = vpop.permute.xlu0 %1035
        %1037 = vrot.lane.b32.xlu0 %v745, 64
        %v1038 = vpop.permute.xlu0 %1037
        %1039 = vrot.lane.b32.xlu0 %v749, 64
        %v1040 = vpop.permute.xlu0 %1039
        %1041 = vrot.lane.b32.xlu0 %v755, 64
        %v1042 = vpop.permute.xlu0 %1041
        %1043 = vrot.lane.b32.xlu0 %v759, 64
        %v1044 = vpop.permute.xlu0 %1043
        %1045 = vrot.lane.b32.xlu0 %v765, 64
        %v1046 = vpop.permute.xlu0 %1045
        %1047 = vrot.lane.b32.xlu0 %v769, 64
        %v1048 = vpop.permute.xlu0 %1047
        %1049 = vrot.lane.b32.xlu0 %v775, 64
        %v1050 = vpop.permute.xlu0 %1049
        %1051 = vrot.lane.b32.xlu0 %v779, 64
        %v1052 = vpop.permute.xlu0 %1051
        %1053 = vrot.lane.b32.xlu0 %v785, 64
        %v1054 = vpop.permute.xlu0 %1053
        %1055 = vrot.lane.b32.xlu0 %v789, 64
        %v1056 = vpop.permute.xlu0 %1055
        %1057 = vrot.lane.b32.xlu0 %v795, 64
        %v1058 = vpop.permute.xlu0 %1057
        %1059 = vrot.lane.b32.xlu0 %v799, 64
        %v1060 = vpop.permute.xlu0 %1059
        %1061 = vrot.lane.b32.xlu0 %v805, 64
        %v1062 = vpop.permute.xlu0 %1061
        %1063 = vrot.lane.b32.xlu0 %v809, 64
        %v1064 = vpop.permute.xlu0 %1063
        %1065 = vrot.lane.b32.xlu0 %v815, 64
        %v1066 = vpop.permute.xlu0 %1065
        %1067 = vrot.lane.b32.xlu0 %v819, 64
        %v1068 = vpop.permute.xlu0 %1067
        %1069 = vrot.lane.b32.xlu0 %v825, 64
        %v1070 = vpop.permute.xlu0 %1069
        %1071 = vrot.lane.b32.xlu0 %v829, 64
        %v1072 = vpop.permute.xlu0 %1071
        %1073 = vrot.lane.b32.xlu0 %v835, 64
        %v1074 = vpop.permute.xlu0 %1073
        %1075 = vrot.lane.b32.xlu0 %v839, 64
        %v1076 = vpop.permute.xlu0 %1075
        %1077 = vrot.lane.b32.xlu0 %v845, 64
        %v1078 = vpop.permute.xlu0 %1077
        %1079 = vrot.lane.b32.xlu0 %v849, 64
        %v1080 = vpop.permute.xlu0 %1079
        %1081 = vrot.lane.b32.xlu0 %v855, 64
        %v1082 = vpop.permute.xlu0 %1081
        %1083 = vrot.lane.b32.xlu0 %v859, 64
        %v1084 = vpop.permute.xlu0 %1083
        %1085 = vrot.lane.b32.xlu0 %v865, 64
        %v1086 = vpop.permute.xlu0 %1085
        %1087 = vrot.lane.b32.xlu0 %v869, 64
        %v1088 = vpop.permute.xlu0 %1087
        %1089 = vrot.lane.b32.xlu0 %v875, 64
        %v1090 = vpop.permute.xlu0 %1089
        %1091 = vrot.lane.b32.xlu0 %v879, 64
        %v1092 = vpop.permute.xlu0 %1091
        %1093 = vrot.lane.b32.xlu0 %v885, 64
        %v1094 = vpop.permute.xlu0 %1093
        %1095 = vrot.lane.b32.xlu0 %v889, 64
        %v1096 = vpop.permute.xlu0 %1095
        %1097 = vrot.lane.b32.xlu0 %v895, 64
        %v1098 = vpop.permute.xlu0 %1097
        %1099 = vrot.lane.b32.xlu0 %v899, 64
        %v1100 = vpop.permute.xlu0 %1099
        %1101 = vrot.lane.b32.xlu0 %v905, 64
        %v1102 = vpop.permute.xlu0 %1101
        %1103 = vrot.lane.b32.xlu0 %v909, 64
        %v1104 = vpop.permute.xlu0 %1103
        %v1169 = vmax.f32 %v595, %v978
        %v1170 = vmax.f32 %v599, %v980
        %v1171 = vmax.f32 %v605, %v982
        %v1172 = vmax.f32 %v609, %v984
        %v1173 = vmax.f32 %v615, %v986
        %v1174 = vmax.f32 %v619, %v988
        %v1175 = vmax.f32 %v625, %v990
        %v1176 = vmax.f32 %v629, %v992
        %v1177 = vmax.f32 %v635, %v994
        %v1178 = vmax.f32 %v639, %v996
        %v1179 = vmax.f32 %v645, %v998
        %v1180 = vmax.f32 %v649, %v1000
        %v1181 = vmax.f32 %v655, %v1002
        %v1182 = vmax.f32 %v659, %v1004
        %v1183 = vmax.f32 %v665, %v1006
        %v1184 = vmax.f32 %v669, %v1008
        %v1185 = vmax.f32 %v675, %v1010
        %v1186 = vmax.f32 %v679, %v1012
        %v1187 = vmax.f32 %v685, %v1014
        %v1188 = vmax.f32 %v689, %v1016
        %v1189 = vmax.f32 %v695, %v1018
        %v1190 = vmax.f32 %v699, %v1020
        %v1191 = vmax.f32 %v705, %v1022
        %v1192 = vmax.f32 %v709, %v1024
        %v1193 = vmax.f32 %v715, %v1026
        %v1194 = vmax.f32 %v719, %v1028
        %v1195 = vmax.f32 %v725, %v1030
        %v1196 = vmax.f32 %v729, %v1032
        %v1197 = vmax.f32 %v735, %v1034
        %v1198 = vmax.f32 %v739, %v1036
        %v1199 = vmax.f32 %v745, %v1038
        %v1200 = vmax.f32 %v749, %v1040
        %v1201 = vmax.f32 %v755, %v1042
        %v1202 = vmax.f32 %v759, %v1044
        %v1203 = vmax.f32 %v765, %v1046
        %v1204 = vmax.f32 %v769, %v1048
        %v1205 = vmax.f32 %v775, %v1050
        %v1206 = vmax.f32 %v779, %v1052
        %v1207 = vmax.f32 %v785, %v1054
        %v1208 = vmax.f32 %v789, %v1056
        %v1209 = vmax.f32 %v795, %v1058
        %v1210 = vmax.f32 %v799, %v1060
        %v1211 = vmax.f32 %v805, %v1062
        %v1212 = vmax.f32 %v809, %v1064
        %v1213 = vmax.f32 %v815, %v1066
        %v1214 = vmax.f32 %v819, %v1068
        %v1215 = vmax.f32 %v825, %v1070
        %v1216 = vmax.f32 %v829, %v1072
        %v1217 = vmax.f32 %v835, %v1074
        %v1218 = vmax.f32 %v839, %v1076
        %v1219 = vmax.f32 %v845, %v1078
        %v1220 = vmax.f32 %v849, %v1080
        %v1221 = vmax.f32 %v855, %v1082
        %v1222 = vmax.f32 %v859, %v1084
        %v1223 = vmax.f32 %v865, %v1086
        %v1224 = vmax.f32 %v869, %v1088
        %v1225 = vmax.f32 %v875, %v1090
        %v1226 = vmax.f32 %v879, %v1092
        %v1227 = vmax.f32 %v885, %v1094
        %v1228 = vmax.f32 %v889, %v1096
        %v1229 = vmax.f32 %v895, %v1098
        %v1230 = vmax.f32 %v899, %v1100
        %v1231 = vmax.f32 %v905, %v1102
        %v1232 = vmax.f32 %v909, %v1104
        %v1233 = vmax.f32 %v1169, %v597
        %v1234 = vmax.f32 %v1170, %v601
        %v1235 = vmax.f32 %v1171, %v607
        %v1236 = vmax.f32 %v1172, %v611
        %v1237 = vmax.f32 %v1173, %v617
        %v1238 = vmax.f32 %v1174, %v621
        %v1239 = vmax.f32 %v1175, %v627
        %v1240 = vmax.f32 %v1176, %v631
        %v1241 = vmax.f32 %v1177, %v637
        %v1242 = vmax.f32 %v1178, %v641
        %v1243 = vmax.f32 %v1179, %v647
        %v1244 = vmax.f32 %v1180, %v651
        %v1245 = vmax.f32 %v1181, %v657
        %v1246 = vmax.f32 %v1182, %v661
        %v1247 = vmax.f32 %v1183, %v667
        %v1248 = vmax.f32 %v1184, %v671
        %v1249 = vmax.f32 %v1185, %v677
        %v1250 = vmax.f32 %v1186, %v681
        %v1251 = vmax.f32 %v1187, %v687
        %v1252 = vmax.f32 %v1188, %v691
        %v1253 = vmax.f32 %v1189, %v697
        %v1254 = vmax.f32 %v1190, %v701
        %v1255 = vmax.f32 %v1191, %v707
        %v1256 = vmax.f32 %v1192, %v711
        %v1257 = vmax.f32 %v1193, %v717
        %v1258 = vmax.f32 %v1194, %v721
        %v1259 = vmax.f32 %v1195, %v727
        %v1260 = vmax.f32 %v1196, %v731
        %v1261 = vmax.f32 %v1197, %v737
        %v1262 = vmax.f32 %v1198, %v741
        %v1263 = vmax.f32 %v1199, %v747
        %v1264 = vmax.f32 %v1200, %v751
        %v1265 = vmax.f32 %v1201, %v757
        %v1266 = vmax.f32 %v1202, %v761
        %v1267 = vmax.f32 %v1203, %v767
        %v1268 = vmax.f32 %v1204, %v771
        %v1269 = vmax.f32 %v1205, %v777
        %v1270 = vmax.f32 %v1206, %v781
        %v1271 = vmax.f32 %v1207, %v787
        %v1272 = vmax.f32 %v1208, %v791
        %v1273 = vmax.f32 %v1209, %v797
        %v1274 = vmax.f32 %v1210, %v801
        %v1275 = vmax.f32 %v1211, %v807
        %v1276 = vmax.f32 %v1212, %v811
        %v1277 = vmax.f32 %v1213, %v817
        %v1278 = vmax.f32 %v1214, %v821
        %v1279 = vmax.f32 %v1215, %v827
        %v1280 = vmax.f32 %v1216, %v831
        %v1281 = vmax.f32 %v1217, %v837
        %v1282 = vmax.f32 %v1218, %v841
        %v1283 = vmax.f32 %v1219, %v847
        %v1284 = vmax.f32 %v1220, %v851
        %v1285 = vmax.f32 %v1221, %v857
        %v1286 = vmax.f32 %v1222, %v861
        %v1287 = vmax.f32 %v1223, %v867
        %v1288 = vmax.f32 %v1224, %v871
        %v1289 = vmax.f32 %v1225, %v877
        %v1290 = vmax.f32 %v1226, %v881
        %v1291 = vmax.f32 %v1227, %v887
        %v1292 = vmax.f32 %v1228, %v891
        %v1293 = vmax.f32 %v1229, %v897
        %v1294 = vmax.f32 %v1230, %v901
        %v1295 = vmax.f32 %v1231, %v907
        %v1296 = vmax.f32 %v1232, %v911
        %1361 = vrot.lane.b32.xlu0 %v597, 64
        %v1362 = vpop.permute.xlu0 %1361
        %1363 = vrot.lane.b32.xlu0 %v601, 64
        %v1364 = vpop.permute.xlu0 %1363
        %1365 = vrot.lane.b32.xlu0 %v607, 64
        %v1366 = vpop.permute.xlu0 %1365
        %1367 = vrot.lane.b32.xlu0 %v611, 64
        %v1368 = vpop.permute.xlu0 %1367
        %1369 = vrot.lane.b32.xlu0 %v617, 64
        %v1370 = vpop.permute.xlu0 %1369
        %1371 = vrot.lane.b32.xlu0 %v621, 64
        %v1372 = vpop.permute.xlu0 %1371
        %1373 = vrot.lane.b32.xlu0 %v627, 64
        %v1374 = vpop.permute.xlu0 %1373
        %1375 = vrot.lane.b32.xlu0 %v631, 64
        %v1376 = vpop.permute.xlu0 %1375
        %1377 = vrot.lane.b32.xlu0 %v637, 64
        %v1378 = vpop.permute.xlu0 %1377
        %1379 = vrot.lane.b32.xlu0 %v641, 64
        %v1380 = vpop.permute.xlu0 %1379
        %1381 = vrot.lane.b32.xlu0 %v647, 64
        %v1382 = vpop.permute.xlu0 %1381
        %1383 = vrot.lane.b32.xlu0 %v651, 64
        %v1384 = vpop.permute.xlu0 %1383
        %1385 = vrot.lane.b32.xlu0 %v657, 64
        %v1386 = vpop.permute.xlu0 %1385
        %1387 = vrot.lane.b32.xlu0 %v661, 64
        %v1388 = vpop.permute.xlu0 %1387
        %1389 = vrot.lane.b32.xlu0 %v667, 64
        %v1390 = vpop.permute.xlu0 %1389
        %1391 = vrot.lane.b32.xlu0 %v671, 64
        %v1392 = vpop.permute.xlu0 %1391
        %1393 = vrot.lane.b32.xlu0 %v677, 64
        %v1394 = vpop.permute.xlu0 %1393
        %1395 = vrot.lane.b32.xlu0 %v681, 64
        %v1396 = vpop.permute.xlu0 %1395
        %1397 = vrot.lane.b32.xlu0 %v687, 64
        %v1398 = vpop.permute.xlu0 %1397
        %1399 = vrot.lane.b32.xlu0 %v691, 64
        %v1400 = vpop.permute.xlu0 %1399
        %1401 = vrot.lane.b32.xlu0 %v697, 64
        %v1402 = vpop.permute.xlu0 %1401
        %1403 = vrot.lane.b32.xlu0 %v701, 64
        %v1404 = vpop.permute.xlu0 %1403
        %1405 = vrot.lane.b32.xlu0 %v707, 64
        %v1406 = vpop.permute.xlu0 %1405
        %1407 = vrot.lane.b32.xlu0 %v711, 64
        %v1408 = vpop.permute.xlu0 %1407
        %1409 = vrot.lane.b32.xlu0 %v717, 64
        %v1410 = vpop.permute.xlu0 %1409
        %1411 = vrot.lane.b32.xlu0 %v721, 64
        %v1412 = vpop.permute.xlu0 %1411
        %1413 = vrot.lane.b32.xlu0 %v727, 64
        %v1414 = vpop.permute.xlu0 %1413
        %1415 = vrot.lane.b32.xlu0 %v731, 64
        %v1416 = vpop.permute.xlu0 %1415
        %1417 = vrot.lane.b32.xlu0 %v737, 64
        %v1418 = vpop.permute.xlu0 %1417
        %1419 = vrot.lane.b32.xlu0 %v741, 64
        %v1420 = vpop.permute.xlu0 %1419
        %1421 = vrot.lane.b32.xlu0 %v747, 64
        %v1422 = vpop.permute.xlu0 %1421
        %1423 = vrot.lane.b32.xlu0 %v751, 64
        %v1424 = vpop.permute.xlu0 %1423
        %1425 = vrot.lane.b32.xlu0 %v757, 64
        %v1426 = vpop.permute.xlu0 %1425
        %1427 = vrot.lane.b32.xlu0 %v761, 64
        %v1428 = vpop.permute.xlu0 %1427
        %1429 = vrot.lane.b32.xlu0 %v767, 64
        %v1430 = vpop.permute.xlu0 %1429
        %1431 = vrot.lane.b32.xlu0 %v771, 64
        %v1432 = vpop.permute.xlu0 %1431
        %1433 = vrot.lane.b32.xlu0 %v777, 64
        %v1434 = vpop.permute.xlu0 %1433
        %1435 = vrot.lane.b32.xlu0 %v781, 64
        %v1436 = vpop.permute.xlu0 %1435
        %1437 = vrot.lane.b32.xlu0 %v787, 64
        %v1438 = vpop.permute.xlu0 %1437
        %1439 = vrot.lane.b32.xlu0 %v791, 64
        %v1440 = vpop.permute.xlu0 %1439
        %1441 = vrot.lane.b32.xlu0 %v797, 64
        %v1442 = vpop.permute.xlu0 %1441
        %1443 = vrot.lane.b32.xlu0 %v801, 64
        %v1444 = vpop.permute.xlu0 %1443
        %1445 = vrot.lane.b32.xlu0 %v807, 64
        %v1446 = vpop.permute.xlu0 %1445
        %1447 = vrot.lane.b32.xlu0 %v811, 64
        %v1448 = vpop.permute.xlu0 %1447
        %1449 = vrot.lane.b32.xlu0 %v817, 64
        %v1450 = vpop.permute.xlu0 %1449
        %1451 = vrot.lane.b32.xlu0 %v821, 64
        %v1452 = vpop.permute.xlu0 %1451
        %1453 = vrot.lane.b32.xlu0 %v827, 64
        %v1454 = vpop.permute.xlu0 %1453
        %1455 = vrot.lane.b32.xlu0 %v831, 64
        %v1456 = vpop.permute.xlu0 %1455
        %1457 = vrot.lane.b32.xlu0 %v837, 64
        %v1458 = vpop.permute.xlu0 %1457
        %1459 = vrot.lane.b32.xlu0 %v841, 64
        %v1460 = vpop.permute.xlu0 %1459
        %1461 = vrot.lane.b32.xlu0 %v847, 64
        %v1462 = vpop.permute.xlu0 %1461
        %1463 = vrot.lane.b32.xlu0 %v851, 64
        %v1464 = vpop.permute.xlu0 %1463
        %1465 = vrot.lane.b32.xlu0 %v857, 64
        %v1466 = vpop.permute.xlu0 %1465
        %1467 = vrot.lane.b32.xlu0 %v861, 64
        %v1468 = vpop.permute.xlu0 %1467
        %1469 = vrot.lane.b32.xlu0 %v867, 64
        %v1470 = vpop.permute.xlu0 %1469
        %1471 = vrot.lane.b32.xlu0 %v871, 64
        %v1472 = vpop.permute.xlu0 %1471
        %1473 = vrot.lane.b32.xlu0 %v877, 64
        %v1474 = vpop.permute.xlu0 %1473
        %1475 = vrot.lane.b32.xlu0 %v881, 64
        %v1476 = vpop.permute.xlu0 %1475
        %1477 = vrot.lane.b32.xlu0 %v887, 64
        %v1478 = vpop.permute.xlu0 %1477
        %1479 = vrot.lane.b32.xlu0 %v891, 64
        %v1480 = vpop.permute.xlu0 %1479
        %1481 = vrot.lane.b32.xlu0 %v897, 64
        %v1482 = vpop.permute.xlu0 %1481
        %1483 = vrot.lane.b32.xlu0 %v901, 64
        %v1484 = vpop.permute.xlu0 %1483
        %1485 = vrot.lane.b32.xlu0 %v907, 64
        %v1486 = vpop.permute.xlu0 %1485
        %1487 = vrot.lane.b32.xlu0 %v911, 64
        %v1488 = vpop.permute.xlu0 %1487
        %v1553 = vmax.f32 %v1233, %v1362
        %v1554 = vmax.f32 %v1234, %v1364
        %v1555 = vmax.f32 %v1235, %v1366
        %v1556 = vmax.f32 %v1236, %v1368
        %v1557 = vmax.f32 %v1237, %v1370
        %v1558 = vmax.f32 %v1238, %v1372
        %v1559 = vmax.f32 %v1239, %v1374
        %v1560 = vmax.f32 %v1240, %v1376
        %v1561 = vmax.f32 %v1241, %v1378
        %v1562 = vmax.f32 %v1242, %v1380
        %v1563 = vmax.f32 %v1243, %v1382
        %v1564 = vmax.f32 %v1244, %v1384
        %v1565 = vmax.f32 %v1245, %v1386
        %v1566 = vmax.f32 %v1246, %v1388
        %v1567 = vmax.f32 %v1247, %v1390
        %v1568 = vmax.f32 %v1248, %v1392
        %v1569 = vmax.f32 %v1249, %v1394
        %v1570 = vmax.f32 %v1250, %v1396
        %v1571 = vmax.f32 %v1251, %v1398
        %v1572 = vmax.f32 %v1252, %v1400
        %v1573 = vmax.f32 %v1253, %v1402
        %v1574 = vmax.f32 %v1254, %v1404
        %v1575 = vmax.f32 %v1255, %v1406
        %v1576 = vmax.f32 %v1256, %v1408
        %v1577 = vmax.f32 %v1257, %v1410
        %v1578 = vmax.f32 %v1258, %v1412
        %v1579 = vmax.f32 %v1259, %v1414
        %v1580 = vmax.f32 %v1260, %v1416
        %v1581 = vmax.f32 %v1261, %v1418
        %v1582 = vmax.f32 %v1262, %v1420
        %v1583 = vmax.f32 %v1263, %v1422
        %v1584 = vmax.f32 %v1264, %v1424
        %v1585 = vmax.f32 %v1265, %v1426
        %v1586 = vmax.f32 %v1266, %v1428
        %v1587 = vmax.f32 %v1267, %v1430
        %v1588 = vmax.f32 %v1268, %v1432
        %v1589 = vmax.f32 %v1269, %v1434
        %v1590 = vmax.f32 %v1270, %v1436
        %v1591 = vmax.f32 %v1271, %v1438
        %v1592 = vmax.f32 %v1272, %v1440
        %v1593 = vmax.f32 %v1273, %v1442
        %v1594 = vmax.f32 %v1274, %v1444
        %v1595 = vmax.f32 %v1275, %v1446
        %v1596 = vmax.f32 %v1276, %v1448
        %v1597 = vmax.f32 %v1277, %v1450
        %v1598 = vmax.f32 %v1278, %v1452
        %v1599 = vmax.f32 %v1279, %v1454
        %v1600 = vmax.f32 %v1280, %v1456
        %v1601 = vmax.f32 %v1281, %v1458
        %v1602 = vmax.f32 %v1282, %v1460
        %v1603 = vmax.f32 %v1283, %v1462
        %v1604 = vmax.f32 %v1284, %v1464
        %v1605 = vmax.f32 %v1285, %v1466
        %v1606 = vmax.f32 %v1286, %v1468
        %v1607 = vmax.f32 %v1287, %v1470
        %v1608 = vmax.f32 %v1288, %v1472
        %v1609 = vmax.f32 %v1289, %v1474
        %v1610 = vmax.f32 %v1290, %v1476
        %v1611 = vmax.f32 %v1291, %v1478
        %v1612 = vmax.f32 %v1292, %v1480
        %v1613 = vmax.f32 %v1293, %v1482
        %v1614 = vmax.f32 %v1294, %v1484
        %v1615 = vmax.f32 %v1295, %v1486
        %v1616 = vmax.f32 %v1296, %v1488
        %v1617 = vld [vmem:[%s2] sm:$0x1]
        %v1619 = vlaneseq
        %v1620 = vshrl.u32 %v1619, 7
        %v1621 = vsub.s32 0, %v1620
        %v1622 = vrot.slane %v1617, %v1621
        %v1624 = vadd.f32 %v1553, %v1622
        %v1625 = vadd.f32 %v1554, %v1622
        %v1626 = vadd.f32 %v1555, %v1622
        %v1627 = vadd.f32 %v1556, %v1622
        %v1628 = vadd.f32 %v1557, %v1622
        %v1629 = vadd.f32 %v1558, %v1622
        %v1630 = vadd.f32 %v1559, %v1622
        %v1631 = vadd.f32 %v1560, %v1622
        %v1632 = vadd.f32 %v1561, %v1622
        %v1633 = vadd.f32 %v1562, %v1622
        %v1634 = vadd.f32 %v1563, %v1622
        %v1635 = vadd.f32 %v1564, %v1622
        %v1636 = vadd.f32 %v1565, %v1622
        %v1637 = vadd.f32 %v1566, %v1622
        %v1638 = vadd.f32 %v1567, %v1622
        %v1639 = vadd.f32 %v1568, %v1622
        %v1640 = vadd.f32 %v1569, %v1622
        %v1641 = vadd.f32 %v1570, %v1622
        %v1642 = vadd.f32 %v1571, %v1622
        %v1643 = vadd.f32 %v1572, %v1622
        %v1644 = vadd.f32 %v1573, %v1622
        %v1645 = vadd.f32 %v1574, %v1622
        %v1646 = vadd.f32 %v1575, %v1622
        %v1647 = vadd.f32 %v1576, %v1622
        %v1648 = vadd.f32 %v1577, %v1622
        %v1649 = vadd.f32 %v1578, %v1622
        %v1650 = vadd.f32 %v1579, %v1622
        %v1651 = vadd.f32 %v1580, %v1622
        %v1652 = vadd.f32 %v1581, %v1622
        %v1653 = vadd.f32 %v1582, %v1622
        %v1654 = vadd.f32 %v1583, %v1622
        %v1655 = vadd.f32 %v1584, %v1622
        %v1656 = vadd.f32 %v1585, %v1622
        %v1657 = vadd.f32 %v1586, %v1622
        %v1658 = vadd.f32 %v1587, %v1622
        %v1659 = vadd.f32 %v1588, %v1622
        %v1660 = vadd.f32 %v1589, %v1622
        %v1661 = vadd.f32 %v1590, %v1622
        %v1662 = vadd.f32 %v1591, %v1622
        %v1663 = vadd.f32 %v1592, %v1622
        %v1664 = vadd.f32 %v1593, %v1622
        %v1665 = vadd.f32 %v1594, %v1622
        %v1666 = vadd.f32 %v1595, %v1622
        %v1667 = vadd.f32 %v1596, %v1622
        %v1668 = vadd.f32 %v1597, %v1622
        %v1669 = vadd.f32 %v1598, %v1622
        %v1670 = vadd.f32 %v1599, %v1622
        %v1671 = vadd.f32 %v1600, %v1622
        %v1672 = vadd.f32 %v1601, %v1622
        %v1673 = vadd.f32 %v1602, %v1622
        %v1674 = vadd.f32 %v1603, %v1622
        %v1675 = vadd.f32 %v1604, %v1622
        %v1676 = vadd.f32 %v1605, %v1622
        %v1677 = vadd.f32 %v1606, %v1622
        %v1678 = vadd.f32 %v1607, %v1622
        %v1679 = vadd.f32 %v1608, %v1622
        %v1680 = vadd.f32 %v1609, %v1622
        %v1681 = vadd.f32 %v1610, %v1622
        %v1682 = vadd.f32 %v1611, %v1622
        %v1683 = vadd.f32 %v1612, %v1622
        %v1684 = vadd.f32 %v1613, %v1622
        %v1685 = vadd.f32 %v1614, %v1622
        %v1686 = vadd.f32 %v1615, %v1622
        %v1687 = vadd.f32 %v1616, %v1622
        %v1688 = vmax.f32 %v1624, 0.0
        %v1689 = vmax.f32 %v1625, 0.0
        %v1690 = vmax.f32 %v1626, 0.0
        %v1691 = vmax.f32 %v1627, 0.0
        %v1692 = vmax.f32 %v1628, 0.0
        %v1693 = vmax.f32 %v1629, 0.0
        %v1694 = vmax.f32 %v1630, 0.0
        %v1695 = vmax.f32 %v1631, 0.0
        %v1696 = vmax.f32 %v1632, 0.0
        %v1697 = vmax.f32 %v1633, 0.0
        %v1698 = vmax.f32 %v1634, 0.0
        %v1699 = vmax.f32 %v1635, 0.0
        %v1700 = vmax.f32 %v1636, 0.0
        %v1701 = vmax.f32 %v1637, 0.0
        %v1702 = vmax.f32 %v1638, 0.0
        %v1703 = vmax.f32 %v1639, 0.0
        %v1704 = vmax.f32 %v1640, 0.0
        %v1705 = vmax.f32 %v1641, 0.0
        %v1706 = vmax.f32 %v1642, 0.0
        %v1707 = vmax.f32 %v1643, 0.0
        %v1708 = vmax.f32 %v1644, 0.0
        %v1709 = vmax.f32 %v1645, 0.0
        %v1710 = vmax.f32 %v1646, 0.0
        %v1711 = vmax.f32 %v1647, 0.0
        %v1712 = vmax.f32 %v1648, 0.0
        %v1713 = vmax.f32 %v1649, 0.0
        %v1714 = vmax.f32 %v1650, 0.0
        %v1715 = vmax.f32 %v1651, 0.0
        %v1716 = vmax.f32 %v1652, 0.0
        %v1717 = vmax.f32 %v1653, 0.0
        %v1718 = vmax.f32 %v1654, 0.0
        %v1719 = vmax.f32 %v1655, 0.0
        %v1720 = vmax.f32 %v1656, 0.0
        %v1721 = vmax.f32 %v1657, 0.0
        %v1722 = vmax.f32 %v1658, 0.0
        %v1723 = vmax.f32 %v1659, 0.0
        %v1724 = vmax.f32 %v1660, 0.0
        %v1725 = vmax.f32 %v1661, 0.0
        %v1726 = vmax.f32 %v1662, 0.0
        %v1727 = vmax.f32 %v1663, 0.0
        %v1728 = vmax.f32 %v1664, 0.0
        %v1729 = vmax.f32 %v1665, 0.0
        %v1730 = vmax.f32 %v1666, 0.0
        %v1731 = vmax.f32 %v1667, 0.0
        %v1732 = vmax.f32 %v1668, 0.0
        %v1733 = vmax.f32 %v1669, 0.0
        %v1734 = vmax.f32 %v1670, 0.0
        %v1735 = vmax.f32 %v1671, 0.0
        %v1736 = vmax.f32 %v1672, 0.0
        %v1737 = vmax.f32 %v1673, 0.0
        %v1738 = vmax.f32 %v1674, 0.0
        %v1739 = vmax.f32 %v1675, 0.0
        %v1740 = vmax.f32 %v1676, 0.0
        %v1741 = vmax.f32 %v1677, 0.0
        %v1742 = vmax.f32 %v1678, 0.0
        %v1743 = vmax.f32 %v1679, 0.0
        %v1744 = vmax.f32 %v1680, 0.0
        %v1745 = vmax.f32 %v1681, 0.0
        %v1746 = vmax.f32 %v1682, 0.0
        %v1747 = vmax.f32 %v1683, 0.0
        %v1748 = vmax.f32 %v1684, 0.0
        %v1749 = vmax.f32 %v1685, 0.0
        %v1750 = vmax.f32 %v1686, 0.0
        %v1751 = vmax.f32 %v1687, 0.0
        %v1752 = vpack.c.bf16 %v1689, %v1688
        %v1753 = vpack.c.bf16 %v1691, %v1690
        %v1754 = vpack.c.bf16 %v1693, %v1692
        %v1755 = vpack.c.bf16 %v1695, %v1694
        %v1756 = vpack.c.bf16 %v1697, %v1696
        %v1757 = vpack.c.bf16 %v1699, %v1698
        %v1758 = vpack.c.bf16 %v1701, %v1700
        %v1759 = vpack.c.bf16 %v1703, %v1702
        %v1760 = vpack.c.bf16 %v1705, %v1704
        %v1761 = vpack.c.bf16 %v1707, %v1706
        %v1762 = vpack.c.bf16 %v1709, %v1708
        %v1763 = vpack.c.bf16 %v1711, %v1710
        %v1764 = vpack.c.bf16 %v1713, %v1712
        %v1765 = vpack.c.bf16 %v1715, %v1714
        %v1766 = vpack.c.bf16 %v1717, %v1716
        %v1767 = vpack.c.bf16 %v1719, %v1718
        %v1768 = vpack.c.bf16 %v1721, %v1720
        %v1769 = vpack.c.bf16 %v1723, %v1722
        %v1770 = vpack.c.bf16 %v1725, %v1724
        %v1771 = vpack.c.bf16 %v1727, %v1726
        %v1772 = vpack.c.bf16 %v1729, %v1728
        %v1773 = vpack.c.bf16 %v1731, %v1730
        %v1774 = vpack.c.bf16 %v1733, %v1732
        %v1775 = vpack.c.bf16 %v1735, %v1734
        %v1776 = vpack.c.bf16 %v1737, %v1736
        %v1777 = vpack.c.bf16 %v1739, %v1738
        %v1778 = vpack.c.bf16 %v1741, %v1740
        %v1779 = vpack.c.bf16 %v1743, %v1742
        %v1780 = vpack.c.bf16 %v1745, %v1744
        %v1781 = vpack.c.bf16 %v1747, %v1746
        %v1782 = vpack.c.bf16 %v1749, %v1748
        %v1783 = vpack.c.bf16 %v1751, %v1750
        %v1816 = vunpack.c.l.b16 %v1752
        %v1817 = vunpack.c.h.b16 %v1752
        %v1818 = vunpack.c.l.b16 %v1753
        %v1819 = vunpack.c.h.b16 %v1753
        %v1820 = vunpack.c.l.b16 %v1754
        %v1821 = vunpack.c.h.b16 %v1754
        %v1822 = vunpack.c.l.b16 %v1755
        %v1823 = vunpack.c.h.b16 %v1755
        %v1824 = vunpack.c.l.b16 %v1756
        %v1825 = vunpack.c.h.b16 %v1756
        %v1826 = vunpack.c.l.b16 %v1757
        %v1827 = vunpack.c.h.b16 %v1757
        %v1828 = vunpack.c.l.b16 %v1758
        %v1829 = vunpack.c.h.b16 %v1758
        %v1830 = vunpack.c.l.b16 %v1759
        %v1831 = vunpack.c.h.b16 %v1759
        %v1832 = vunpack.c.l.b16 %v1760
        %v1833 = vunpack.c.h.b16 %v1760
        %v1834 = vunpack.c.l.b16 %v1761
        %v1835 = vunpack.c.h.b16 %v1761
        %v1836 = vunpack.c.l.b16 %v1762
        %v1837 = vunpack.c.h.b16 %v1762
        %v1838 = vunpack.c.l.b16 %v1763
        %v1839 = vunpack.c.h.b16 %v1763
        %v1840 = vunpack.c.l.b16 %v1764
        %v1841 = vunpack.c.h.b16 %v1764
        %v1842 = vunpack.c.l.b16 %v1765
        %v1843 = vunpack.c.h.b16 %v1765
        %v1844 = vunpack.c.l.b16 %v1766
        %v1845 = vunpack.c.h.b16 %v1766
        %v1846 = vunpack.c.l.b16 %v1767
        %v1847 = vunpack.c.h.b16 %v1767
        %v1848 = vunpack.c.l.b16 %v1768
        %v1849 = vunpack.c.h.b16 %v1768
        %v1850 = vunpack.c.l.b16 %v1769
        %v1851 = vunpack.c.h.b16 %v1769
        %v1852 = vunpack.c.l.b16 %v1770
        %v1853 = vunpack.c.h.b16 %v1770
        %v1854 = vunpack.c.l.b16 %v1771
        %v1855 = vunpack.c.h.b16 %v1771
        %v1856 = vunpack.c.l.b16 %v1772
        %v1857 = vunpack.c.h.b16 %v1772
        %v1858 = vunpack.c.l.b16 %v1773
        %v1859 = vunpack.c.h.b16 %v1773
        %v1860 = vunpack.c.l.b16 %v1774
        %v1861 = vunpack.c.h.b16 %v1774
        %v1862 = vunpack.c.l.b16 %v1775
        %v1863 = vunpack.c.h.b16 %v1775
        %v1864 = vunpack.c.l.b16 %v1776
        %v1865 = vunpack.c.h.b16 %v1776
        %v1866 = vunpack.c.l.b16 %v1777
        %v1867 = vunpack.c.h.b16 %v1777
        %v1868 = vunpack.c.l.b16 %v1778
        %v1869 = vunpack.c.h.b16 %v1778
        %v1870 = vunpack.c.l.b16 %v1779
        %v1871 = vunpack.c.h.b16 %v1779
        %v1872 = vunpack.c.l.b16 %v1780
        %v1873 = vunpack.c.h.b16 %v1780
        %v1874 = vunpack.c.l.b16 %v1781
        %v1875 = vunpack.c.h.b16 %v1781
        %v1876 = vunpack.c.l.b16 %v1782
        %v1877 = vunpack.c.h.b16 %v1782
        %v1878 = vunpack.c.l.b16 %v1783
        %v1879 = vunpack.c.h.b16 %v1783
        %v1880 = vpack.c.b16 %v1816, %v1816
        %v1881 = vpack.c.b16 %v1817, %v1817
        %v1882 = vpack.c.b16 %v1818, %v1818
        %v1883 = vpack.c.b16 %v1819, %v1819
        %v1884 = vpack.c.b16 %v1820, %v1820
        %v1885 = vpack.c.b16 %v1821, %v1821
        %v1886 = vpack.c.b16 %v1822, %v1822
        %v1887 = vpack.c.b16 %v1823, %v1823
        %v1888 = vpack.c.b16 %v1824, %v1824
        %v1889 = vpack.c.b16 %v1825, %v1825
        %v1890 = vpack.c.b16 %v1826, %v1826
        %v1891 = vpack.c.b16 %v1827, %v1827
        %v1892 = vpack.c.b16 %v1828, %v1828
        %v1893 = vpack.c.b16 %v1829, %v1829
        %v1894 = vpack.c.b16 %v1830, %v1830
        %v1895 = vpack.c.b16 %v1831, %v1831
        %v1896 = vpack.c.b16 %v1832, %v1832
        %v1897 = vpack.c.b16 %v1833, %v1833
        %v1898 = vpack.c.b16 %v1834, %v1834
        %v1899 = vpack.c.b16 %v1835, %v1835
        %v1900 = vpack.c.b16 %v1836, %v1836
        %v1901 = vpack.c.b16 %v1837, %v1837
        %v1902 = vpack.c.b16 %v1838, %v1838
        %v1903 = vpack.c.b16 %v1839, %v1839
        %v1904 = vpack.c.b16 %v1840, %v1840
        %v1905 = vpack.c.b16 %v1841, %v1841
        %v1906 = vpack.c.b16 %v1842, %v1842
        %v1907 = vpack.c.b16 %v1843, %v1843
        %v1908 = vpack.c.b16 %v1844, %v1844
        %v1909 = vpack.c.b16 %v1845, %v1845
        %v1910 = vpack.c.b16 %v1846, %v1846
        %v1911 = vpack.c.b16 %v1847, %v1847
        %v1912 = vpack.c.b16 %v1848, %v1848
        %v1913 = vpack.c.b16 %v1849, %v1849
        %v1914 = vpack.c.b16 %v1850, %v1850
        %v1915 = vpack.c.b16 %v1851, %v1851
        %v1916 = vpack.c.b16 %v1852, %v1852
        %v1917 = vpack.c.b16 %v1853, %v1853
        %v1918 = vpack.c.b16 %v1854, %v1854
        %v1919 = vpack.c.b16 %v1855, %v1855
        %v1920 = vpack.c.b16 %v1856, %v1856
        %v1921 = vpack.c.b16 %v1857, %v1857
        %v1922 = vpack.c.b16 %v1858, %v1858
        %v1923 = vpack.c.b16 %v1859, %v1859
        %v1924 = vpack.c.b16 %v1860, %v1860
        %v1925 = vpack.c.b16 %v1861, %v1861
        %v1926 = vpack.c.b16 %v1862, %v1862
        %v1927 = vpack.c.b16 %v1863, %v1863
        %v1928 = vpack.c.b16 %v1864, %v1864
        %v1929 = vpack.c.b16 %v1865, %v1865
        %v1930 = vpack.c.b16 %v1866, %v1866
        %v1931 = vpack.c.b16 %v1867, %v1867
        %v1932 = vpack.c.b16 %v1868, %v1868
        %v1933 = vpack.c.b16 %v1869, %v1869
        %v1934 = vpack.c.b16 %v1870, %v1870
        %v1935 = vpack.c.b16 %v1871, %v1871
        %v1936 = vpack.c.b16 %v1872, %v1872
        %v1937 = vpack.c.b16 %v1873, %v1873
        %v1938 = vpack.c.b16 %v1874, %v1874
        %v1939 = vpack.c.b16 %v1875, %v1875
        %v1940 = vpack.c.b16 %v1876, %v1876
        %v1941 = vpack.c.b16 %v1877, %v1877
        %v1942 = vpack.c.b16 %v1878, %v1878
        %v1943 = vpack.c.b16 %v1879, %v1879
        %vm2008 = vcmask 519168
        %2009 = vst.msk [vmem:[%s204] sm:$0xf] %vm2008, %v1880
        %2010 = vst.msk [vmem:[%s204 + $0x4] sm:$0xf] %vm2008, %v1881
        %2011 = vst.msk [vmem:[%s204 + $0x8] sm:$0xf] %vm2008, %v1882
        %2012 = vst.msk [vmem:[%s204 + $0xc] sm:$0xf] %vm2008, %v1883
        %2013 = vst.msk [vmem:[%s204 + $0x10] sm:$0xf] %vm2008, %v1884
        %2014 = vst.msk [vmem:[%s204 + $0x14] sm:$0xf] %vm2008, %v1885
        %2015 = vst.msk [vmem:[%s204 + $0x18] sm:$0xf] %vm2008, %v1886
        %2016 = vst.msk [vmem:[%s204 + $0x1c] sm:$0xf] %vm2008, %v1887
        %2017 = vst.msk [vmem:[%s204 + $0x20] sm:$0xf] %vm2008, %v1888
        %2018 = vst.msk [vmem:[%s204 + $0x24] sm:$0xf] %vm2008, %v1889
        %2019 = vst.msk [vmem:[%s204 + $0x28] sm:$0xf] %vm2008, %v1890
        %2020 = vst.msk [vmem:[%s204 + $0x2c] sm:$0xf] %vm2008, %v1891
        %2021 = vst.msk [vmem:[%s204 + $0x30] sm:$0xf] %vm2008, %v1892
        %2022 = vst.msk [vmem:[%s204 + $0x34] sm:$0xf] %vm2008, %v1893
        %2023 = vst.msk [vmem:[%s204 + $0x38] sm:$0xf] %vm2008, %v1894
        %2024 = vst.msk [vmem:[%s204 + $0x3c] sm:$0xf] %vm2008, %v1895
        %2025 = vst.msk [vmem:[%s204 + $0x40] sm:$0xf] %vm2008, %v1896
        %2026 = vst.msk [vmem:[%s204 + $0x44] sm:$0xf] %vm2008, %v1897
        %2027 = vst.msk [vmem:[%s204 + $0x48] sm:$0xf] %vm2008, %v1898
        %2028 = vst.msk [vmem:[%s204 + $0x4c] sm:$0xf] %vm2008, %v1899
        %2029 = vst.msk [vmem:[%s204 + $0x50] sm:$0xf] %vm2008, %v1900
        %2030 = vst.msk [vmem:[%s204 + $0x54] sm:$0xf] %vm2008, %v1901
        %2031 = vst.msk [vmem:[%s204 + $0x58] sm:$0xf] %vm2008, %v1902
        %2032 = vst.msk [vmem:[%s204 + $0x5c] sm:$0xf] %vm2008, %v1903
        %2033 = vst.msk [vmem:[%s204 + $0x60] sm:$0xf] %vm2008, %v1904
        %2034 = vst.msk [vmem:[%s204 + $0x64] sm:$0xf] %vm2008, %v1905
        %2035 = vst.msk [vmem:[%s204 + $0x68] sm:$0xf] %vm2008, %v1906
        %2036 = vst.msk [vmem:[%s204 + $0x6c] sm:$0xf] %vm2008, %v1907
        %2037 = vst.msk [vmem:[%s204 + $0x70] sm:$0xf] %vm2008, %v1908
        %2038 = vst.msk [vmem:[%s204 + $0x74] sm:$0xf] %vm2008, %v1909
        %2039 = vst.msk [vmem:[%s204 + $0x78] sm:$0xf] %vm2008, %v1910
        %2040 = vst.msk [vmem:[%s204 + $0x7c] sm:$0xf] %vm2008, %v1911
        %2041 = vst.msk [vmem:[%s204 + $0x80] sm:$0xf] %vm2008, %v1912
        %2042 = vst.msk [vmem:[%s204 + $0x84] sm:$0xf] %vm2008, %v1913
        %2043 = vst.msk [vmem:[%s204 + $0x88] sm:$0xf] %vm2008, %v1914
        %2044 = vst.msk [vmem:[%s204 + $0x8c] sm:$0xf] %vm2008, %v1915
        %2045 = vst.msk [vmem:[%s204 + $0x90] sm:$0xf] %vm2008, %v1916
        %2046 = vst.msk [vmem:[%s204 + $0x94] sm:$0xf] %vm2008, %v1917
        %2047 = vst.msk [vmem:[%s204 + $0x98] sm:$0xf] %vm2008, %v1918
        %2048 = vst.msk [vmem:[%s204 + $0x9c] sm:$0xf] %vm2008, %v1919
        %2049 = vst.msk [vmem:[%s204 + $0xa0] sm:$0xf] %vm2008, %v1920
        %2050 = vst.msk [vmem:[%s204 + $0xa4] sm:$0xf] %vm2008, %v1921
        %2051 = vst.msk [vmem:[%s204 + $0xa8] sm:$0xf] %vm2008, %v1922
        %2052 = vst.msk [vmem:[%s204 + $0xac] sm:$0xf] %vm2008, %v1923
        %2053 = vst.msk [vmem:[%s204 + $0xb0] sm:$0xf] %vm2008, %v1924
        %2054 = vst.msk [vmem:[%s204 + $0xb4] sm:$0xf] %vm2008, %v1925
        %2055 = vst.msk [vmem:[%s204 + $0xb8] sm:$0xf] %vm2008, %v1926
        %2056 = vst.msk [vmem:[%s204 + $0xbc] sm:$0xf] %vm2008, %v1927
        %2057 = vst.msk [vmem:[%s204 + $0xc0] sm:$0xf] %vm2008, %v1928
        %2058 = vst.msk [vmem:[%s204 + $0xc4] sm:$0xf] %vm2008, %v1929
        %2059 = vst.msk [vmem:[%s204 + $0xc8] sm:$0xf] %vm2008, %v1930
        %2060 = vst.msk [vmem:[%s204 + $0xcc] sm:$0xf] %vm2008, %v1931
        %2061 = vst.msk [vmem:[%s204 + $0xd0] sm:$0xf] %vm2008, %v1932
        %2062 = vst.msk [vmem:[%s204 + $0xd4] sm:$0xf] %vm2008, %v1933
        %2063 = vst.msk [vmem:[%s204 + $0xd8] sm:$0xf] %vm2008, %v1934
        %2064 = vst.msk [vmem:[%s204 + $0xdc] sm:$0xf] %vm2008, %v1935
        %2065 = vst.msk [vmem:[%s204 + $0xe0] sm:$0xf] %vm2008, %v1936
        %2066 = vst.msk [vmem:[%s204 + $0xe4] sm:$0xf] %vm2008, %v1937
        %2067 = vst.msk [vmem:[%s204 + $0xe8] sm:$0xf] %vm2008, %v1938
        %2068 = vst.msk [vmem:[%s204 + $0xec] sm:$0xf] %vm2008, %v1939
        %2069 = vst.msk [vmem:[%s204 + $0xf0] sm:$0xf] %vm2008, %v1940
        %2070 = vst.msk [vmem:[%s204 + $0xf4] sm:$0xf] %vm2008, %v1941
        %2071 = vst.msk [vmem:[%s204 + $0xf8] sm:$0xf] %vm2008, %v1942
        %2072 = vst.msk [vmem:[%s204 + $0xfc] sm:$0xf] %vm2008, %v1943
        %s2073 = sand.u32 %s97, 1
        %s2074 = scalar_lea.sflag [#allocation4], %s2073
        %s2075 = sand.u32 %s97, 1
        %s2076 = smul.addr %s2075, 256
        %s2077 = scalar_lea.vmem [#allocation7], %s2076
        // Predicated region
        $region41: #{tpu_custom_call.1} parent=31 // pred_check
          %p2078 = pneg %p107
        $region42: #{tpu_custom_call.1} parent=31 // pred_check_branch
          %2080 = sbr.rel (%p2078) target = $region44
        $region43: #{tpu_custom_call.1} parent=31 // pred_region
          %s2081 = smul.u32 2, %s21
          %s2083 = ssub.s32 4096, 4096
          %2084 = vsyncadd %s2074, %s2083
          %s2085 = smul.addr %s2081, 32
          %s2086 = smul.addr %s2085, 64
          %s2087 = scalar_lea.hbm %s3, %s2086
          %s2088 = sshll.u32 %s2077, 4
          %s2089 = int_to_ptr.vmem [resolvable:$true] %s2088
          %2094 = dma.vmem_to_hbm [thread:$0]  %s2089, 4096, %s2087, %s2074, 64, 64, 4
        $region44: #{tpu_custom_call.1} parent=31 // pred_fallthru
          _
      $region32: #{tpu_custom_call.1} parent=5 // pred_fallthru
        _
      %p2095 = scmp.le.s32.totalorder 2, %s16
      // Predicated region
      $region45: #{tpu_custom_call.1} parent=5 // pred_check
        %p2096 = pneg %p2095
      $region46: #{tpu_custom_call.1} parent=5 // pred_check_branch
        %2098 = sbr.rel (%p2096) target = $region48
      $region47: #{tpu_custom_call.1} parent=5 // pred_region
        %s2099 = ssub.s32 %s16, 2
        // Predicated region
        $region49: #{tpu_custom_call.1} parent=47 // pred_check
          %p2100 = pneg %p113
        $region50: #{tpu_custom_call.1} parent=47 // pred_check_branch
          %2102 = sbr.rel (%p2100) target = $region52
        $region51: #{tpu_custom_call.1} parent=47 // pred_region
          %s2103 = sand.u32 %s98, 1
          %s2104 = scalar_lea.sflag [#allocation4], %s2103
          %s2105 = sand.u32 %s98, 1
          %s2106 = smul.addr %s2105, 256
          %s2107 = scalar_lea.vmem [#allocation7], %s2106
          %2108 = dma.done %s2104, 4096
        $region52: #{tpu_custom_call.1} parent=47 // pred_fallthru
          _
      $region48: #{tpu_custom_call.1} parent=5 // pred_fallthru
        _
    $region6: #{tpu_custom_call.1} parent=1 // loop_footer
      %s20 = sadd.s32 1, %s16
    $region7: #{tpu_custom_call.1} parent=1 // loop_footer_branch
      %15 = sbr.rel target = $region3
    $region8: #{tpu_custom_call.1} parent=1 // loop_exit
      _
    %2109 = vsyncpa [#allocation3], 1
    %s2110 = scalar_lea.sflag [#allocation3], 1
    %2111 = vsyncpa %s2110, 1
    %2112 = vsyncpa [#allocation6], 1
    %2113 = vsyncpa [#allocation4], 1
    %s2114 = scalar_lea.sflag [#allocation4], 1
    %2115 = vsyncpa %s2114, 1

</llo_original>
